<compile_context>
chip_gen: v7x
topology: tpu7x:2x2x1
jax: 0.10.0
libtpu: 0.0.40
codegen_flags: <defaults>
</compile_context>

<pallas_src>
import jax
import jax.numpy as jnp
from jax.experimental import pallas as pl
from jax.experimental.pallas import tpu as pltpu

STATS_LANES = 128  # partial-stat blocks are written 128 lanes wide (lane-dense stores)


# ---------------- Kernels ----------------

def fused_conv_pool_kernel(xw_ref, w_ref, b_ref, pooled_ref, psum_ref, psq_ref):
    """conv3x3x3 + bias + ReLU + 2x2x2 max-pool + BN partial stats for one tile.

    xw_ref     : (K, TB)       4x4x4 input windows, K = 64*Cin on sublanes,
                               TB pooled spatial positions (one batch elem) on lanes.
    w_ref      : (8, Cout, K)  zero-scattered conv weights, one slab per pooling phase.
    b_ref      : (Cout, 1)     conv bias.
    pooled_ref : (Cout, TB)    pooled activations (lane-dense, NC(DHW) layout).
    psum_ref   : (Cout, 128)   per-tile sum of pooled values (replicated over lanes).
    psq_ref    : (Cout, 128)   per-tile sum of squares       (replicated over lanes).
    """
    x = xw_ref[...]                                                  # (K, TB)

    # Max over the 8 pooling phases of the phase convolution.  Bias-add and ReLU
    # commute with the max, so they are applied once at the end.
    m = jnp.dot(w_ref[0], x, preferred_element_type=jnp.float32)
    for p in range(1, 8):
        m = jnp.maximum(m, jnp.dot(w_ref[p], x,
                                   preferred_element_type=jnp.float32))
    m = jnp.maximum(m + b_ref[...], 0.0)                             # (Cout, TB)

    pooled_ref[...] = m

    # Per-tile partial statistics for training-mode BatchNorm.  They are stored
    # replicated across 128 lanes so the block shape stays (8,128)-legal and the
    # store is a single unmasked vst; the BN kernel divides the factor back out.
    s = jnp.sum(m, axis=1, keepdims=True)                            # (Cout, 1)
    sq = jnp.sum(m * m, axis=1, keepdims=True)                       # (Cout, 1)
    psum_ref[...] = jnp.broadcast_to(s, psum_ref.shape)
    psq_ref[...] = jnp.broadcast_to(sq, psq_ref.shape)


def make_bn_kernel(count, eps):
    inv_n = 1.0 / float(count)
    inv_rep = 1.0 / float(STATS_LANES)

    def bn_kernel(pooled_ref, psum_ref, psq_ref, gamma_ref, beta_ref, o_ref):
        s = jnp.sum(psum_ref[...], axis=1, keepdims=True) * inv_rep   # (Cout, 1)
        sq = jnp.sum(psq_ref[...], axis=1, keepdims=True) * inv_rep   # (Cout, 1)
        mean = s * inv_n
        var = jnp.maximum(sq * inv_n - mean * mean, 0.0)  # biased var (PyTorch BN train)
        scale = jax.lax.rsqrt(var + eps) * gamma_ref[...]
        o_ref[...] = (pooled_ref[...] - mean) * scale + beta_ref[...]

    return bn_kernel


# ---------------- Wrapper ----------------

def _pick_spatial_tile(nsp, k):
    """Largest lane tile: full Nsp if its (K, TB) block is small, else a 128-multiple divisor."""
    budget = 2 * 1024 * 1024                     # bytes for one (K, TB) f32 input block
    if nsp < 128 or nsp * k * 4 <= budget:
        return nsp
    cands = [t for t in range(128, nsp, 128) if nsp % t == 0 and t * k * 4 <= budget]
    return max(cands) if cands else nsp


def cnn_block_3d(x_ncdhw, conv_w, conv_b, gamma, beta, eps=1e-5):
    B, Cin, D, H, W = x_ncdhw.shape
    Cout = conv_w.shape[0]
    assert conv_w.shape == (Cout, Cin, 3, 3, 3)
    assert D % 2 == 0 and H % 2 == 0 and W % 2 == 0, "MaxPool3d(2) needs even D/H/W"
    Do, Ho, Wo = D // 2, H // 2, W // 2
    Nsp = Do * Ho * Wo
    K = 64 * Cin
    f32 = jnp.float32

    x = x_ncdhw.astype(f32)

    # ---- glue: gather the 4x4x4 input window of every pooled output voxel ----
    # (channels-first end to end: no NCDHW <-> channels-last transposes anywhere)
    xp = jnp.pad(x, ((0, 0), (0, 0), (1, 1), (1, 1), (1, 1)))
    slabs = []
    for dw in range(4):
        for hw in range(4):
            for ww in range(4):
                slabs.append(xp[:, :, dw:dw + D:2, hw:hw + H:2, ww:ww + W:2])
    xw = jnp.stack(slabs, axis=2)                   # (B, Cin, 64, Do, Ho, Wo)
    xw = xw.reshape(B, K, Nsp)                      # K order = (ci, dw, hw, ww)

    # ---- glue: zero-scattered weights, one (Cout, 64*Cin) slab per pooling phase ----
    w = conv_w.astype(f32)
    phase_w = []
    for pd in range(2):
        for ph in range(2):
            for pw in range(2):
                wp = jnp.zeros((Cout, Cin, 4, 4, 4), f32)
                wp = wp.at[:, :, pd:pd + 3, ph:ph + 3, pw:pw + 3].set(w)
                phase_w.append(wp.reshape(Cout, K))
    w_all = jnp.stack(phase_w, axis=0)              # (8, Cout, K)
    bias = conv_b.astype(f32).reshape(Cout, 1)

    TB = _pick_spatial_tile(Nsp, K)
    assert Nsp % TB == 0
    NB = Nsp // TB
    G = B * NB                                      # total grid tiles
    # TODO(synk): add a K-tiling grid axis (VMEM accumulator + pl.when) once
    # 64*Cin*TB*4B blocks approach the v7x 64 MiB VMEM budget.

    pooled, psum, psq = pl.pallas_call(
        fused_conv_pool_kernel,
        out_shape=(
            jax.ShapeDtypeStruct((B, Cout, Nsp), f32),
            jax.ShapeDtypeStruct((Cout, G * STATS_LANES), f32),
            jax.ShapeDtypeStruct((Cout, G * STATS_LANES), f32),
        ),
        grid=(B, NB),
        in_specs=[
            pl.BlockSpec((None, K, TB), lambda b, n: (b, 0, n)),
            pl.BlockSpec((8, Cout, K), lambda b, n: (0, 0, 0)),
            pl.BlockSpec((Cout, 1), lambda b, n: (0, 0)),
        ],
        out_specs=(
            pl.BlockSpec((None, Cout, TB), lambda b, n: (b, 0, n)),
            pl.BlockSpec((Cout, STATS_LANES), lambda b, n: (0, b * NB + n)),
            pl.BlockSpec((Cout, STATS_LANES), lambda b, n: (0, b * NB + n)),
        ),
        compiler_params=pltpu.CompilerParams(
            dimension_semantics=("parallel", "parallel")),
    )(xw, w_all, bias)

    bn_kernel = make_bn_kernel(B * Nsp, float(eps))
    out_flat = pl.pallas_call(
        bn_kernel,
        out_shape=jax.ShapeDtypeStruct((B, Cout, Nsp), f32),
        grid=(B, NB),
        in_specs=[
            pl.BlockSpec((None, Cout, TB), lambda b, n: (b, 0, n)),
            pl.BlockSpec((Cout, G * STATS_LANES), lambda b, n: (0, 0)),
            pl.BlockSpec((Cout, G * STATS_LANES), lambda b, n: (0, 0)),
            pl.BlockSpec((Cout, 1), lambda b, n: (0, 0)),
            pl.BlockSpec((Cout, 1), lambda b, n: (0, 0)),
        ],
        out_specs=pl.BlockSpec((None, Cout, TB), lambda b, n: (b, 0, n)),
        compiler_params=pltpu.CompilerParams(
            dimension_semantics=("parallel", "parallel")),
    )(pooled, psum, psq,
      gamma.astype(f32).reshape(Cout, 1), beta.astype(f32).reshape(Cout, 1))

    # (B, Cout, Do*Ho*Wo) is already NCDHW-flat: the final reshape is free.
    return out_flat.reshape(B, Cout, Do, Ho, Wo)


# ---------------- Pure-JAX reference for verification ----------------

def reference(x, w, b, gamma, beta, eps=1e-5):
    conv = jax.lax.conv_general_dilated(
        x, w, window_strides=(1, 1, 1),
        padding=((1, 1), (1, 1), (1, 1)),
        dimension_numbers=('NCDHW', 'OIDHW', 'NCDHW'),
        precision=jax.lax.Precision.HIGHEST)
    conv = conv + b.reshape(1, -1, 1, 1, 1)
    r = jnp.maximum(conv, 0.0)
    B, C, D, H, W = r.shape
    p = r.reshape(B, C, D // 2, 2, H // 2, 2, W // 2, 2).max(axis=(3, 5, 7))
    mean = p.mean(axis=(0, 2, 3, 4), keepdims=True)
    var = ((p - mean) ** 2).mean(axis=(0, 2, 3, 4), keepdims=True)
    return ((p - mean) / jnp.sqrt(var + eps) * gamma.reshape(1, -1, 1, 1, 1)
            + beta.reshape(1, -1, 1, 1, 1))


if __name__ == "__main__":
    key = jax.random.PRNGKey(0)
    k1, k2, k3 = jax.random.split(key, 3)

    B, Cin, Cout, D, H, W = 2, 4, 8, 8, 8, 8
    x = jax.random.normal(k1, (B, Cin, D, H, W), jnp.float32)
    conv_w = jax.random.normal(k2, (Cout, Cin, 3, 3, 3), jnp.float32) * 0.1
    conv_b = jax.random.normal(k3, (Cout,), jnp.float32) * 0.1
    gamma = jnp.ones((Cout,), jnp.float32)   # BatchNorm3d affine init
    beta = jnp.zeros((Cout,), jnp.float32)
    # TODO(synk): BatchNorm running_mean/running_var buffer updates (training-mode
    # side effect) are not produced; they do not affect the forward output.

    fwd = jax.jit(cnn_block_3d)
    out = jax.block_until_ready(fwd(x, conv_w, conv_b, gamma, beta))

    ref = reference(x, conv_w, conv_b, gamma, beta)
    assert out.shape == (B, Cout, D // 2, H // 2, W // 2), out.shape
    assert bool(jnp.all(jnp.isfinite(out)))
    err = float(jnp.max(jnp.abs(out - ref)))
    assert err < 2e-2, f"max abs err {err}"

    print("KERNEL_OK")
</pallas_src>

<mosaic_0001>
module attributes {stable_mosaic.version = 11 : i64} {
  func.func @fused_conv_pool_kernel(%arg0: i32, %arg1: i32, %arg2: memref<1x256x64xf32, #tpu.memory_space<vmem>>, %arg3: memref<8x8x256xf32, #tpu.memory_space<vmem>>, %arg4: memref<8x1xf32, #tpu.memory_space<vmem>>, %arg5: memref<1x8x64xf32, #tpu.memory_space<vmem>>, %arg6: memref<8x128xf32, #tpu.memory_space<vmem>>, %arg7: memref<8x128xf32, #tpu.memory_space<vmem>>) attributes {dimension_semantics = [#tpu.dimension_semantics<parallel>, #tpu.dimension_semantics<parallel>], iteration_bounds = array<i64: 2, 1>, scalar_prefetch = 0 : i64, scratch_operands = 0 : i64, tpu.core_type = #tpu.core_type<tc>, window_params = [{transform_indices = @transform_0, window_bounds = array<i64: 1, 256, 64>}, {pipeline_mode = #tpu.pipeline_mode<synchronous>, transform_indices = @transform_1, window_bounds = array<i64: 8, 8, 256>}, {pipeline_mode = #tpu.pipeline_mode<synchronous>, transform_indices = @transform_2, window_bounds = array<i64: 8, 1>}, {transform_indices = @transform_3, window_bounds = array<i64: 1, 8, 64>}, {transform_indices = @transform_4, window_bounds = array<i64: 8, 128>}, {transform_indices = @transform_5, window_bounds = array<i64: 8, 128>}]} {
    %c0 = arith.constant 0 : index
    %c0_0 = arith.constant 0 : index
    %c0_1 = arith.constant 0 : index
    %0 = vector.load %arg2[%c0, %c0_0, %c0_1] : memref<1x256x64xf32, #tpu.memory_space<vmem>>, vector<1x256x64xf32>
    %1 = vector.shape_cast %0 : vector<1x256x64xf32> to vector<256x64xf32>
    %c0_2 = arith.constant 0 : index
    %c0_3 = arith.constant 0 : index
    %c0_4 = arith.constant 0 : index
    %2 = vector.load %arg3[%c0_2, %c0_3, %c0_4] : memref<8x8x256xf32, #tpu.memory_space<vmem>>, vector<1x8x256xf32>
    %3 = vector.shape_cast %2 : vector<1x8x256xf32> to vector<8x256xf32>
    %cst = arith.constant dense<0.000000e+00> : vector<8x64xf32>
    %4 = tpu.matmul %3, %1, %cst {dimension_numbers = #tpu.dot_dimension_numbers<[1], [0], [0], [1], [0, 0, 1, 1], [], []>} : vector<8x256xf32>, vector<256x64xf32>, vector<8x64xf32> -> vector<8x64xf32>
    %c1 = arith.constant 1 : index
    %c0_5 = arith.constant 0 : index
    %c0_6 = arith.constant 0 : index
    %5 = vector.load %arg3[%c1, %c0_5, %c0_6] : memref<8x8x256xf32, #tpu.memory_space<vmem>>, vector<1x8x256xf32>
    %6 = vector.shape_cast %5 : vector<1x8x256xf32> to vector<8x256xf32>
    %cst_7 = arith.constant dense<0.000000e+00> : vector<8x64xf32>
    %7 = tpu.matmul %6, %1, %cst_7 {dimension_numbers = #tpu.dot_dimension_numbers<[1], [0], [0], [1], [0, 0, 1, 1], [], []>} : vector<8x256xf32>, vector<256x64xf32>, vector<8x64xf32> -> vector<8x64xf32>
    %8 = arith.maximumf %4, %7 : vector<8x64xf32>
    %c2 = arith.constant 2 : index
    %c0_8 = arith.constant 0 : index
    %c0_9 = arith.constant 0 : index
    %9 = vector.load %arg3[%c2, %c0_8, %c0_9] : memref<8x8x256xf32, #tpu.memory_space<vmem>>, vector<1x8x256xf32>
    %10 = vector.shape_cast %9 : vector<1x8x256xf32> to vector<8x256xf32>
    %cst_10 = arith.constant dense<0.000000e+00> : vector<8x64xf32>
    %11 = tpu.matmul %10, %1, %cst_10 {dimension_numbers = #tpu.dot_dimension_numbers<[1], [0], [0], [1], [0, 0, 1, 1], [], []>} : vector<8x256xf32>, vector<256x64xf32>, vector<8x64xf32> -> vector<8x64xf32>
    %12 = arith.maximumf %8, %11 : vector<8x64xf32>
    %c3 = arith.constant 3 : index
    %c0_11 = arith.constant 0 : index
    %c0_12 = arith.constant 0 : index
    %13 = vector.load %arg3[%c3, %c0_11, %c0_12] : memref<8x8x256xf32, #tpu.memory_space<vmem>>, vector<1x8x256xf32>
    %14 = vector.shape_cast %13 : vector<1x8x256xf32> to vector<8x256xf32>
    %cst_13 = arith.constant dense<0.000000e+00> : vector<8x64xf32>
    %15 = tpu.matmul %14, %1, %cst_13 {dimension_numbers = #tpu.dot_dimension_numbers<[1], [0], [0], [1], [0, 0, 1, 1], [], []>} : vector<8x256xf32>, vector<256x64xf32>, vector<8x64xf32> -> vector<8x64xf32>
    %16 = arith.maximumf %12, %15 : vector<8x64xf32>
    %c4 = arith.constant 4 : index
    %c0_14 = arith.constant 0 : index
    %c0_15 = arith.constant 0 : index
    %17 = vector.load %arg3[%c4, %c0_14, %c0_15] : memref<8x8x256xf32, #tpu.memory_space<vmem>>, vector<1x8x256xf32>
    %18 = vector.shape_cast %17 : vector<1x8x256xf32> to vector<8x256xf32>
    %cst_16 = arith.constant dense<0.000000e+00> : vector<8x64xf32>
    %19 = tpu.matmul %18, %1, %cst_16 {dimension_numbers = #tpu.dot_dimension_numbers<[1], [0], [0], [1], [0, 0, 1, 1], [], []>} : vector<8x256xf32>, vector<256x64xf32>, vector<8x64xf32> -> vector<8x64xf32>
    %20 = arith.maximumf %16, %19 : vector<8x64xf32>
    %c5 = arith.constant 5 : index
    %c0_17 = arith.constant 0 : index
    %c0_18 = arith.constant 0 : index
    %21 = vector.load %arg3[%c5, %c0_17, %c0_18] : memref<8x8x256xf32, #tpu.memory_space<vmem>>, vector<1x8x256xf32>
    %22 = vector.shape_cast %21 : vector<1x8x256xf32> to vector<8x256xf32>
    %cst_19 = arith.constant dense<0.000000e+00> : vector<8x64xf32>
    %23 = tpu.matmul %22, %1, %cst_19 {dimension_numbers = #tpu.dot_dimension_numbers<[1], [0], [0], [1], [0, 0, 1, 1], [], []>} : vector<8x256xf32>, vector<256x64xf32>, vector<8x64xf32> -> vector<8x64xf32>
    %24 = arith.maximumf %20, %23 : vector<8x64xf32>
    %c6 = arith.constant 6 : index
    %c0_20 = arith.constant 0 : index
    %c0_21 = arith.constant 0 : index
    %25 = vector.load %arg3[%c6, %c0_20, %c0_21] : memref<8x8x256xf32, #tpu.memory_space<vmem>>, vector<1x8x256xf32>
    %26 = vector.shape_cast %25 : vector<1x8x256xf32> to vector<8x256xf32>
    %cst_22 = arith.constant dense<0.000000e+00> : vector<8x64xf32>
    %27 = tpu.matmul %26, %1, %cst_22 {dimension_numbers = #tpu.dot_dimension_numbers<[1], [0], [0], [1], [0, 0, 1, 1], [], []>} : vector<8x256xf32>, vector<256x64xf32>, vector<8x64xf32> -> vector<8x64xf32>
    %28 = arith.maximumf %24, %27 : vector<8x64xf32>
    %c7 = arith.constant 7 : index
    %c0_23 = arith.constant 0 : index
    %c0_24 = arith.constant 0 : index
    %29 = vector.load %arg3[%c7, %c0_23, %c0_24] : memref<8x8x256xf32, #tpu.memory_space<vmem>>, vector<1x8x256xf32>
    %30 = vector.shape_cast %29 : vector<1x8x256xf32> to vector<8x256xf32>
    %cst_25 = arith.constant dense<0.000000e+00> : vector<8x64xf32>
    %31 = tpu.matmul %30, %1, %cst_25 {dimension_numbers = #tpu.dot_dimension_numbers<[1], [0], [0], [1], [0, 0, 1, 1], [], []>} : vector<8x256xf32>, vector<256x64xf32>, vector<8x64xf32> -> vector<8x64xf32>
    %32 = arith.maximumf %28, %31 : vector<8x64xf32>
    %c0_26 = arith.constant 0 : index
    %c0_27 = arith.constant 0 : index
    %33 = vector.load %arg4[%c0_26, %c0_27] : memref<8x1xf32, #tpu.memory_space<vmem>>, vector<8x1xf32>
    %34 = vector.broadcast %33 : vector<8x1xf32> to vector<8x64xf32>
    %35 = arith.addf %32, %34 : vector<8x64xf32>
    %cst_28 = arith.constant 0.000000e+00 : f32
    %36 = vector.broadcast %cst_28 : f32 to vector<8x64xf32>
    %37 = arith.maximumf %35, %36 : vector<8x64xf32>
    %c0_29 = arith.constant 0 : index
    %c0_30 = arith.constant 0 : index
    %c0_31 = arith.constant 0 : index
    %38 = vector.load %arg5[%c0_29, %c0_30, %c0_31] : memref<1x8x64xf32, #tpu.memory_space<vmem>>, vector<1x8x64xf32>
    %39 = vector.shape_cast %38 : vector<1x8x64xf32> to vector<8x64xf32>
    %40 = vector.shape_cast %37 : vector<8x64xf32> to vector<1x8x64xf32>
    tpu.vector_store %arg5[%c0_29, %c0_30, %c0_31], %40 {strides = array<i32>} : memref<1x8x64xf32, #tpu.memory_space<vmem>>, vector<1x8x64xf32>,
    %cst_32 = arith.constant dense<0.000000e+00> : vector<8xf32>
    %41 = vector.multi_reduction <add>, %37, %cst_32 [1] : vector<8x64xf32> to vector<8xf32>
    %42 = vector.shape_cast %41 : vector<8xf32> to vector<8x1xf32>
    %43 = arith.mulf %37, %37 : vector<8x64xf32>
    %cst_33 = arith.constant dense<0.000000e+00> : vector<8xf32>
    %44 = vector.multi_reduction <add>, %43, %cst_33 [1] : vector<8x64xf32> to vector<8xf32>
    %45 = vector.shape_cast %44 : vector<8xf32> to vector<8x1xf32>
    %46 = vector.shape_cast %42 : vector<8x1xf32> to vector<8x1xf32>
    %47 = vector.broadcast %46 : vector<8x1xf32> to vector<8x128xf32>
    %c0_34 = arith.constant 0 : index
    %c0_35 = arith.constant 0 : index
    %48 = vector.load %arg6[%c0_34, %c0_35] : memref<8x128xf32, #tpu.memory_space<vmem>>, vector<8x128xf32>
    tpu.vector_store %arg6[%c0_34, %c0_35], %47 {strides = array<i32>} : memref<8x128xf32, #tpu.memory_space<vmem>>, vector<8x128xf32>,
    %49 = vector.shape_cast %45 : vector<8x1xf32> to vector<8x1xf32>
    %50 = vector.broadcast %49 : vector<8x1xf32> to vector<8x128xf32>
    %c0_36 = arith.constant 0 : index
    %c0_37 = arith.constant 0 : index
    %51 = vector.load %arg7[%c0_36, %c0_37] : memref<8x128xf32, #tpu.memory_space<vmem>>, vector<8x128xf32>
    tpu.vector_store %arg7[%c0_36, %c0_37], %50 {strides = array<i32>} : memref<8x128xf32, #tpu.memory_space<vmem>>, vector<8x128xf32>,
    return
  }
  func.func @transform_0(%arg0: i32, %arg1: i32) -> (i32, i32, i32) {
    %c0_i32 = arith.constant 0 : i32
    %c0_i32_0 = arith.constant 0 : i32
    return %arg0, %c0_i32, %arg1 : i32, i32, i32
  }
  func.func @transform_1(%arg0: i32, %arg1: i32) -> (i32, i32, i32) {
    %c0_i32 = arith.constant 0 : i32
    %c0_i32_0 = arith.constant 0 : i32
    %c0_i32_1 = arith.constant 0 : i32
    %c0_i32_2 = arith.constant 0 : i32
    return %c0_i32, %c0_i32_0, %c0_i32_1 : i32, i32, i32
  }
  func.func @transform_2(%arg0: i32, %arg1: i32) -> (i32, i32) {
    %c0_i32 = arith.constant 0 : i32
    %c0_i32_0 = arith.constant 0 : i32
    %c0_i32_1 = arith.constant 0 : i32
    return %c0_i32, %c0_i32_0 : i32, i32
  }
  func.func @transform_3(%arg0: i32, %arg1: i32) -> (i32, i32, i32) {
    %c0_i32 = arith.constant 0 : i32
    %c0_i32_0 = arith.constant 0 : i32
    return %arg0, %c0_i32, %arg1 : i32, i32, i32
  }
  func.func @transform_4(%arg0: i32, %arg1: i32) -> (i32, i32) {
    %c1_i32 = arith.constant 1 : i32
    %0 = arith.muli %arg0, %c1_i32 : i32
    %1 = arith.addi %0, %arg1 : i32
    %c0_i32 = arith.constant 0 : i32
    %c0_i32_0 = arith.constant 0 : i32
    return %c0_i32, %1 : i32, i32
  }
  func.func @transform_5(%arg0: i32, %arg1: i32) -> (i32, i32) {
    %c1_i32 = arith.constant 1 : i32
    %0 = arith.muli %arg0, %c1_i32 : i32
    %1 = arith.addi %0, %arg1 : i32
    %c0_i32 = arith.constant 0 : i32
    %c0_i32_0 = arith.constant 0 : i32
    return %c0_i32, %1 : i32, i32
  }
}

module attributes {stable_mosaic.version = 11 : i64} {
  func.func @bn_kernel(%arg0: i32, %arg1: i32, %arg2: memref<1x8x64xf32, #tpu.memory_space<vmem>>, %arg3: memref<8x256xf32, #tpu.memory_space<vmem>>, %arg4: memref<8x256xf32, #tpu.memory_space<vmem>>, %arg5: memref<8x1xf32, #tpu.memory_space<vmem>>, %arg6: memref<8x1xf32, #tpu.memory_space<vmem>>, %arg7: memref<1x8x64xf32, #tpu.memory_space<vmem>>) attributes {dimension_semantics = [#tpu.dimension_semantics<parallel>, #tpu.dimension_semantics<parallel>], iteration_bounds = array<i64: 2, 1>, scalar_prefetch = 0 : i64, scratch_operands = 0 : i64, tpu.core_type = #tpu.core_type<tc>, window_params = [{transform_indices = @transform_0, window_bounds = array<i64: 1, 8, 64>}, {pipeline_mode = #tpu.pipeline_mode<synchronous>, transform_indices = @transform_1, window_bounds = array<i64: 8, 256>}, {pipeline_mode = #tpu.pipeline_mode<synchronous>, transform_indices = @transform_2, window_bounds = array<i64: 8, 256>}, {pipeline_mode = #tpu.pipeline_mode<synchronous>, transform_indices = @transform_3, window_bounds = array<i64: 8, 1>}, {pipeline_mode = #tpu.pipeline_mode<synchronous>, transform_indices = @transform_4, window_bounds = array<i64: 8, 1>}, {transform_indices = @transform_5, window_bounds = array<i64: 1, 8, 64>}]} {
    %c0 = arith.constant 0 : index
    %c0_0 = arith.constant 0 : index
    %0 = vector.load %arg3[%c0, %c0_0] : memref<8x256xf32, #tpu.memory_space<vmem>>, vector<8x256xf32>
    %cst = arith.constant dense<0.000000e+00> : vector<8xf32>
    %1 = vector.multi_reduction <add>, %0, %cst [1] : vector<8x256xf32> to vector<8xf32>
    %2 = vector.shape_cast %1 : vector<8xf32> to vector<8x1xf32>
    %cst_1 = arith.constant 7.812500e-03 : f32
    %3 = vector.broadcast %cst_1 : f32 to vector<8x1xf32>
    %4 = arith.mulf %2, %3 : vector<8x1xf32>
    %c0_2 = arith.constant 0 : index
    %c0_3 = arith.constant 0 : index
    %5 = vector.load %arg4[%c0_2, %c0_3] : memref<8x256xf32, #tpu.memory_space<vmem>>, vector<8x256xf32>
    %cst_4 = arith.constant dense<0.000000e+00> : vector<8xf32>
    %6 = vector.multi_reduction <add>, %5, %cst_4 [1] : vector<8x256xf32> to vector<8xf32>
    %7 = vector.shape_cast %6 : vector<8xf32> to vector<8x1xf32>
    %cst_5 = arith.constant 7.812500e-03 : f32
    %8 = vector.broadcast %cst_5 : f32 to vector<8x1xf32>
    %9 = arith.mulf %7, %8 : vector<8x1xf32>
    %cst_6 = arith.constant 7.812500e-03 : f32
    %10 = vector.broadcast %cst_6 : f32 to vector<8x1xf32>
    %11 = arith.mulf %4, %10 : vector<8x1xf32>
    %cst_7 = arith.constant 7.812500e-03 : f32
    %12 = vector.broadcast %cst_7 : f32 to vector<8x1xf32>
    %13 = arith.mulf %9, %12 : vector<8x1xf32>
    %14 = arith.mulf %11, %11 : vector<8x1xf32>
    %15 = arith.subf %13, %14 : vector<8x1xf32>
    %cst_8 = arith.constant 0.000000e+00 : f32
    %16 = vector.broadcast %cst_8 : f32 to vector<8x1xf32>
    %17 = arith.maximumf %15, %16 : vector<8x1xf32>
    %cst_9 = arith.constant 9.99999974E-6 : f32
    %18 = vector.broadcast %cst_9 : f32 to vector<8x1xf32>
    %19 = arith.addf %17, %18 : vector<8x1xf32>
    %20 = math.rsqrt %19 : vector<8x1xf32>
    %c0_10 = arith.constant 0 : index
    %c0_11 = arith.constant 0 : index
    %21 = vector.load %arg5[%c0_10, %c0_11] : memref<8x1xf32, #tpu.memory_space<vmem>>, vector<8x1xf32>
    %22 = arith.mulf %20, %21 : vector<8x1xf32>
    %c0_12 = arith.constant 0 : index
    %c0_13 = arith.constant 0 : index
    %c0_14 = arith.constant 0 : index
    %23 = vector.load %arg2[%c0_12, %c0_13, %c0_14] : memref<1x8x64xf32, #tpu.memory_space<vmem>>, vector<1x8x64xf32>
    %24 = vector.shape_cast %23 : vector<1x8x64xf32> to vector<8x64xf32>
    %25 = vector.broadcast %11 : vector<8x1xf32> to vector<8x64xf32>
    %26 = arith.subf %24, %25 : vector<8x64xf32>
    %27 = vector.broadcast %22 : vector<8x1xf32> to vector<8x64xf32>
    %28 = arith.mulf %26, %27 : vector<8x64xf32>
    %c0_15 = arith.constant 0 : index
    %c0_16 = arith.constant 0 : index
    %29 = vector.load %arg6[%c0_15, %c0_16] : memref<8x1xf32, #tpu.memory_space<vmem>>, vector<8x1xf32>
    %30 = vector.broadcast %29 : vector<8x1xf32> to vector<8x64xf32>
    %31 = arith.addf %28, %30 : vector<8x64xf32>
    %c0_17 = arith.constant 0 : index
    %c0_18 = arith.constant 0 : index
    %c0_19 = arith.constant 0 : index
    %32 = vector.load %arg7[%c0_17, %c0_18, %c0_19] : memref<1x8x64xf32, #tpu.memory_space<vmem>>, vector<1x8x64xf32>
    %33 = vector.shape_cast %32 : vector<1x8x64xf32> to vector<8x64xf32>
    %34 = vector.shape_cast %31 : vector<8x64xf32> to vector<1x8x64xf32>
    tpu.vector_store %arg7[%c0_17, %c0_18, %c0_19], %34 {strides = array<i32>} : memref<1x8x64xf32, #tpu.memory_space<vmem>>, vector<1x8x64xf32>,
    return
  }
  func.func @transform_0(%arg0: i32, %arg1: i32) -> (i32, i32, i32) {
    %c0_i32 = arith.constant 0 : i32
    %c0_i32_0 = arith.constant 0 : i32
    return %arg0, %c0_i32, %arg1 : i32, i32, i32
  }
  func.func @transform_1(%arg0: i32, %arg1: i32) -> (i32, i32) {
    %c0_i32 = arith.constant 0 : i32
    %c0_i32_0 = arith.constant 0 : i32
    %c0_i32_1 = arith.constant 0 : i32
    return %c0_i32, %c0_i32_0 : i32, i32
  }
  func.func @transform_2(%arg0: i32, %arg1: i32) -> (i32, i32) {
    %c0_i32 = arith.constant 0 : i32
    %c0_i32_0 = arith.constant 0 : i32
    %c0_i32_1 = arith.constant 0 : i32
    return %c0_i32, %c0_i32_0 : i32, i32
  }
  func.func @transform_3(%arg0: i32, %arg1: i32) -> (i32, i32) {
    %c0_i32 = arith.constant 0 : i32
    %c0_i32_0 = arith.constant 0 : i32
    %c0_i32_1 = arith.constant 0 : i32
    return %c0_i32, %c0_i32_0 : i32, i32
  }
  func.func @transform_4(%arg0: i32, %arg1: i32) -> (i32, i32) {
    %c0_i32 = arith.constant 0 : i32
    %c0_i32_0 = arith.constant 0 : i32
    %c0_i32_1 = arith.constant 0 : i32
    return %c0_i32, %c0_i32_0 : i32, i32
  }
  func.func @transform_5(%arg0: i32, %arg1: i32) -> (i32, i32, i32) {
    %c0_i32 = arith.constant 0 : i32
    %c0_i32_0 = arith.constant 0 : i32
    return %arg0, %c0_i32, %arg1 : i32, i32, i32
  }
}

</mosaic_0001>

<llo_original>
// kernel: cnn_block_3d.3
$region0: #{cnn_block_3d.3}
  #allocation0 [shape = 'u32[]', space=smem, size = 0x4, offset = 0x4, fixed_abs, tag = 'smem constant byte address 0x4 - core index']
  #allocation1 [shape = 'u32[144,128]{1,0:T(1,128)}', space=vmem, size = 0x12000, scoped, tag = 'internal scratch']
  %s0 = inlined_call_operand.vmem [shape: f32[2,8,64], index: 0, kind: input, shape index: {}]
  %s1 = inlined_call_operand.vmem [shape: f32[8,256], index: 1, kind: input, shape index: {}]
  %s2 = inlined_call_operand.vmem [shape: f32[8,256], index: 2, kind: input, shape index: {}]
  %s3 = inlined_call_operand.vmem [shape: f32[8,1], index: 3, kind: input, shape index: {}]
  %s4 = inlined_call_operand.vmem [shape: f32[8,1], index: 4, kind: input, shape index: {}]
  %s5 = inlined_call_operand.vmem [shape: f32[2,8,64], index: 5, kind: output, shape index: {}]
  %s6 = sld [smem:[#allocation0]]
  $region53: #{cnn_block_3d.3} parent=0
    _
  %s8 = ssub.s32 1, %s6
  %s9 = scalar_select 0, %s8, %s6
  loop: start=0, step=1, limit=4
  $region2: #{cnn_block_3d.3} parent=0 // loop_pre_header
    _
  $region3: #{cnn_block_3d.3} parent=0 // loop_header
    %s11 = sphi 0, %s15
    %p12 = scmp.ge.s32.totalorder %s11, 4
    %s18 = sphi 0, %s30
    %s19 = sphi 0, %s26
    %s20 = sphi 0, %s18
    %s21 = sphi 0, %s19
    %s22 = sphi 0, %s20
    %s23 = sphi 0, %s21
    %s35 = sphi 0, %s37
    %s38 = sphi 0, %s35
    %s39 = sphi 0, %s38
    %s55 = sphi 0, %s39
    %s59 = sphi 0, %s59
    %s61 = sphi 0, %s59
    %s62 = sphi 0, %s61
    %s76 = sphi 0, %s62
    %s80 = sphi 0, %s80
    %s82 = sphi 0, %s80
    %s83 = sphi 0, %s82
    %s97 = sphi 0, %s83
    %s101 = sphi 0, %s101
    %s103 = sphi 0, %s101
    %s104 = sphi 0, %s103
    %s118 = sphi 0, %s104
    %s122 = sphi 0, %s122
    %s124 = sphi 0, %s122
    %s125 = sphi 0, %s124
    %s139 = sphi 0, %s125
    %s147 = sphi 0, %s149
    %s150 = sphi 0, %s147
    %s151 = sphi 0, %s150
    %s167 = sphi 0, %s151
  $region4: #{cnn_block_3d.3} parent=0 // loop_header_branch
    %14 = sbr.rel (%p12) target = $region8
  $region5: #{cnn_block_3d.3} parent=0 // loop_body
    %s16 = ssub.s32 %s11, 1
    %s17 = ssub.s32 %s11, 2
    %s24 = sadd.s32 1, %s19
    %p25 = scmp.ge.s32.totalorder %s24, 1
    %s26 = scalar_select %p25, 0, %s24
    %s27 = sadd.s32 1, %s18
    %s28 = scalar_select %p25, %s27, %s18
    %p29 = scmp.ge.s32.totalorder %s28, 2
    %s30 = scalar_select %p29, 0, %s28
    %s31 = ssub.s32 %s18, %s30
    %s32 = ssub.s32 %s19, %s26
    %s33 = sor.u32 %s31, %s32
    %p34 = scmp.eq.s32.totalorder %s33, 0
    %s36 = sadd.s32 %s35, 1
    %s37 = scalar_select %p34, %s35, %s36
    %p40 = pneg %p34
    %p41 = scmp.eq.s32.totalorder %s11, 1
    %p42 = por %p40, %p41
    %p43 = scmp.ne.s32.totalorder %s35, %s38
    %p44 = scmp.eq.s32.totalorder %s11, 0
    %p45 = por %p43, %p44
    %p46 = scmp.ne.s32.totalorder %s35, %s38
    %p47 = scmp.eq.s32.totalorder %s16, 1
    %p48 = por %p46, %p47
    %p49 = scmp.ne.s32.totalorder %s38, %s39
    %p50 = scmp.eq.s32.totalorder %s16, 0
    %p51 = por %p49, %p50
    %p52 = scmp.ne.s32.totalorder %s38, %s39
    %p53 = scmp.eq.s32.totalorder %s17, 1
    %p54 = por %p52, %p53
    %p56 = scmp.ne.s32.totalorder %s39, %s55
    %p57 = scmp.eq.s32.totalorder %s17, 0
    %p58 = por %p56, %p57
    %s60 = sadd.s32 %s59, 1
    %p63 = scmp.eq.s32.totalorder %s11, 1
    %p64 = scmp.ne.s32.totalorder %s59, %s61
    %p65 = scmp.eq.s32.totalorder %s11, 0
    %p66 = por %p64, %p65
    %p67 = scmp.ne.s32.totalorder %s59, %s61
    %p68 = scmp.eq.s32.totalorder %s16, 1
    %p69 = por %p67, %p68
    %p70 = scmp.ne.s32.totalorder %s61, %s62
    %p71 = scmp.eq.s32.totalorder %s16, 0
    %p72 = por %p70, %p71
    %p73 = scmp.ne.s32.totalorder %s61, %s62
    %p74 = scmp.eq.s32.totalorder %s17, 1
    %p75 = por %p73, %p74
    %p77 = scmp.ne.s32.totalorder %s62, %s76
    %p78 = scmp.eq.s32.totalorder %s17, 0
    %p79 = por %p77, %p78
    %s81 = sadd.s32 %s80, 1
    %p84 = scmp.eq.s32.totalorder %s11, 1
    %p85 = scmp.ne.s32.totalorder %s80, %s82
    %p86 = scmp.eq.s32.totalorder %s11, 0
    %p87 = por %p85, %p86
    %p88 = scmp.ne.s32.totalorder %s80, %s82
    %p89 = scmp.eq.s32.totalorder %s16, 1
    %p90 = por %p88, %p89
    %p91 = scmp.ne.s32.totalorder %s82, %s83
    %p92 = scmp.eq.s32.totalorder %s16, 0
    %p93 = por %p91, %p92
    %p94 = scmp.ne.s32.totalorder %s82, %s83
    %p95 = scmp.eq.s32.totalorder %s17, 1
    %p96 = por %p94, %p95
    %p98 = scmp.ne.s32.totalorder %s83, %s97
    %p99 = scmp.eq.s32.totalorder %s17, 0
    %p100 = por %p98, %p99
    %s102 = sadd.s32 %s101, 1
    %p105 = scmp.eq.s32.totalorder %s11, 1
    %p106 = scmp.ne.s32.totalorder %s101, %s103
    %p107 = scmp.eq.s32.totalorder %s11, 0
    %p108 = por %p106, %p107
    %p109 = scmp.ne.s32.totalorder %s101, %s103
    %p110 = scmp.eq.s32.totalorder %s16, 1
    %p111 = por %p109, %p110
    %p112 = scmp.ne.s32.totalorder %s103, %s104
    %p113 = scmp.eq.s32.totalorder %s16, 0
    %p114 = por %p112, %p113
    %p115 = scmp.ne.s32.totalorder %s103, %s104
    %p116 = scmp.eq.s32.totalorder %s17, 1
    %p117 = por %p115, %p116
    %p119 = scmp.ne.s32.totalorder %s104, %s118
    %p120 = scmp.eq.s32.totalorder %s17, 0
    %p121 = por %p119, %p120
    %s123 = sadd.s32 %s122, 1
    %p126 = scmp.eq.s32.totalorder %s11, 1
    %p127 = scmp.ne.s32.totalorder %s122, %s124
    %p128 = scmp.eq.s32.totalorder %s11, 0
    %p129 = por %p127, %p128
    %p130 = scmp.ne.s32.totalorder %s122, %s124
    %p131 = scmp.eq.s32.totalorder %s16, 1
    %p132 = por %p130, %p131
    %p133 = scmp.ne.s32.totalorder %s124, %s125
    %p134 = scmp.eq.s32.totalorder %s16, 0
    %p135 = por %p133, %p134
    %p136 = scmp.ne.s32.totalorder %s124, %s125
    %p137 = scmp.eq.s32.totalorder %s17, 1
    %p138 = por %p136, %p137
    %p140 = scmp.ne.s32.totalorder %s125, %s139
    %p141 = scmp.eq.s32.totalorder %s17, 0
    %p142 = por %p140, %p141
    %s143 = ssub.s32 %s18, %s30
    %s144 = ssub.s32 %s19, %s26
    %s145 = sor.u32 %s143, %s144
    %p146 = scmp.eq.s32.totalorder %s145, 0
    %s148 = sadd.s32 %s147, 1
    %s149 = scalar_select %p146, %s147, %s148
    %p152 = pneg %p146
    %p153 = scmp.eq.s32.totalorder %s11, 1
    %p154 = por %p152, %p153
    %p155 = scmp.ne.s32.totalorder %s147, %s150
    %p156 = scmp.eq.s32.totalorder %s11, 0
    %p157 = por %p155, %p156
    %p158 = scmp.ne.s32.totalorder %s147, %s150
    %p159 = scmp.eq.s32.totalorder %s16, 1
    %p160 = por %p158, %p159
    %p161 = scmp.ne.s32.totalorder %s150, %s151
    %p162 = scmp.eq.s32.totalorder %s16, 0
    %p163 = por %p161, %p162
    %p164 = scmp.ne.s32.totalorder %s150, %s151
    %p165 = scmp.eq.s32.totalorder %s17, 1
    %p166 = por %p164, %p165
    %p168 = scmp.ne.s32.totalorder %s151, %s167
    %p169 = scmp.eq.s32.totalorder %s17, 0
    %p170 = por %p168, %p169
    %p171 = scmp.le.s32.totalorder 1, %s11
    %p172 = scmp.lt.s32.totalorder %s11, 3
    %p173 = pnand %p171, %p172
    %p174 = pneg %p173
    // Predicated region
    $region9: #{cnn_block_3d.3} parent=5 // pred_check
      _
    $region10: #{cnn_block_3d.3} parent=5 // pred_check_branch
      %176 = sbr.rel (%p173) target = $region12
    $region11: #{cnn_block_3d.3} parent=5 // pred_region
      %s177 = ssub.s32 %s11, 1
      // Predicated region
      $region13: #{cnn_block_3d.3} parent=11 // pred_check
        %p178 = pneg %p72
      $region14: #{cnn_block_3d.3} parent=11 // pred_check_branch
        %180 = sbr.rel (%p178) target = $region16
      $region15: #{cnn_block_3d.3} parent=11 // pred_region
        _
      $region16: #{cnn_block_3d.3} parent=11 // pred_fallthru
        _
      // Predicated region
      $region17: #{cnn_block_3d.3} parent=11 // pred_check
        %p181 = pneg %p93
      $region18: #{cnn_block_3d.3} parent=11 // pred_check_branch
        %183 = sbr.rel (%p181) target = $region20
      $region19: #{cnn_block_3d.3} parent=11 // pred_region
        _
      $region20: #{cnn_block_3d.3} parent=11 // pred_fallthru
        _
      // Predicated region
      $region21: #{cnn_block_3d.3} parent=11 // pred_check
        %p184 = pneg %p114
      $region22: #{cnn_block_3d.3} parent=11 // pred_check_branch
        %186 = sbr.rel (%p184) target = $region24
      $region23: #{cnn_block_3d.3} parent=11 // pred_region
        _
      $region24: #{cnn_block_3d.3} parent=11 // pred_fallthru
        _
      // Predicated region
      $region25: #{cnn_block_3d.3} parent=11 // pred_check
        %p187 = pneg %p135
      $region26: #{cnn_block_3d.3} parent=11 // pred_check_branch
        %189 = sbr.rel (%p187) target = $region28
      $region27: #{cnn_block_3d.3} parent=11 // pred_region
        _
      $region28: #{cnn_block_3d.3} parent=11 // pred_fallthru
        _
    $region12: #{cnn_block_3d.3} parent=5 // pred_fallthru
      _
    %p190 = scmp.lt.s32.totalorder %s11, 2
    // Predicated region
    $region29: #{cnn_block_3d.3} parent=5 // pred_check
      %p191 = pneg %p190
    $region30: #{cnn_block_3d.3} parent=5 // pred_check_branch
      %193 = sbr.rel (%p191) target = $region32
    $region31: #{cnn_block_3d.3} parent=5 // pred_region
      // Predicated region
      $region33: #{cnn_block_3d.3} parent=31 // pred_check
        %p194 = pneg %p45
      $region34: #{cnn_block_3d.3} parent=31 // pred_check_branch
        %196 = sbr.rel (%p194) target = $region36
      $region35: #{cnn_block_3d.3} parent=31 // pred_region
        %p197 = scmp.lt.s32.totalorder %s18, 1
        %s198 = scalar_select %p197, %s18, 1
        %p199 = scmp.lt.s32.totalorder %s19, 0
        %s200 = scalar_select %p199, %s19, 0
        %s201 = sadd.s32 %s200, %s198
        %s202 = smul.addr %s201, 8
        %s203 = scalar_lea.vmem %s0, %s202
      $region36: #{cnn_block_3d.3} parent=31 // pred_fallthru
        _
    $region32: #{cnn_block_3d.3} parent=5 // pred_fallthru
      _
    %p204 = scmp.le.s32.totalorder 1, %s11
    %p205 = scmp.lt.s32.totalorder %s11, 3
    %p206 = pnand %p204, %p205
    %p207 = pneg %p206
    // Predicated region
    $region37: #{cnn_block_3d.3} parent=5 // pred_check
      _
    $region38: #{cnn_block_3d.3} parent=5 // pred_check_branch
      %209 = sbr.rel (%p206) target = $region40
    $region39: #{cnn_block_3d.3} parent=5 // pred_region
      %s210 = ssub.s32 %s11, 1
      %p211 = scmp.lt.s32.totalorder %s20, 1
      %s212 = scalar_select %p211, %s20, 1
      %p213 = scmp.lt.s32.totalorder %s21, 0
      %s214 = scalar_select %p213, %s21, 0
      %s215 = sadd.s32 %s214, %s212
      %s216 = smul.addr %s215, 8
      %s217 = scalar_lea.vmem %s0, %s216
      %p218 = pneg %p51
      %p219 = pneg %p48
      %p220 = pneg %p72
      %p221 = pneg %p69
      %p222 = pneg %p93
      %p223 = pneg %p90
      %p224 = pneg %p114
      %p225 = pneg %p111
      %p226 = pneg %p135
      %p227 = pneg %p132
      %p228 = pneg %p163
      %p229 = pneg %p160
      %p230 = scmp.lt.s32.totalorder %s20, 1
      %s231 = scalar_select %p230, %s20, 1
      %p232 = scmp.lt.s32.totalorder %s21, 0
      %s233 = scalar_select %p232, %s21, 0
      %s234 = sadd.s32 %s233, %s231
      %s235 = smul.addr %s234, 8
      %s236 = scalar_lea.vmem %s5, %s235
      %p237 = scmp.lt.s32.totalorder %s20, 1
      %s238 = scalar_select %p237, %s20, 1
      %p239 = scmp.lt.s32.totalorder %s21, 0
      %s240 = scalar_select %p239, %s21, 0
      %s241 = sadd.s32 %s240, %s238
      %s242 = smul.addr %s241, 8
      %s243 = scalar_lea.vmem %s0, %s242
      %p244 = scmp.lt.s32.totalorder %s20, 1
      %s245 = scalar_select %p244, %s20, 1
      %p246 = scmp.lt.s32.totalorder %s21, 0
      %s247 = scalar_select %p246, %s21, 0
      %s248 = sadd.s32 %s247, %s245
      %s249 = smul.addr %s248, 8
      %s250 = scalar_lea.vmem %s5, %s249
      %v251 = vld [vmem:[%s1] sm:$0xff]
      %v252 = vld [vmem:[%s1 + $0x8] sm:$0xff]
      %v253 = vadd.f32 %v251, %v252
      %254 = vadd.xlane.f32.xlu0 %v253
      %v255 = vpop.xlane.xlu0 %254
      %v256 = vmul.f32 %v255, 0.0078125
      %v257 = vld [vmem:[%s2] sm:$0xff]
      %v258 = vld [vmem:[%s2 + $0x8] sm:$0xff]
      %v259 = vadd.f32 %v257, %v258
      %260 = vadd.xlane.f32.xlu0 %v259
      %v261 = vpop.xlane.xlu0 %260
      %v262 = vmul.f32 %v261, 0.0078125
      %v263 = vmul.f32 %v256, 0.0078125
      %v264 = vmul.f32 %v262, 0.0078125
      %v265 = vmul.f32 %v263, %v263
      %v266 = vsub.f32 %v264, %v265
      %v267 = vmax.f32 %v266, 0.0
      %v268 = vadd.f32 %v267, 1e-05
      %v269 = vrsqrt.pop %v268
      %v270 = vld [vmem:[%s3] sm:$0xff]
      %v271 = vmul.f32 %v269, %v270
      %v272 = vld [vmem:[%s243] sm:$0xff]
      %v273 = vsub.f32 %v272, %v263
      %275 = vset.pattern.permute.xlu0 0
      %276 = vperm.xlu0 %275, %v271
      %v277 = vpop.permute.xlu0 %276
      %v279 = vmul.f32 %v273, %v277
      %v280 = vld [vmem:[%s4] sm:$0xff]
      %282 = vset.pattern.permute.xlu0 0
      %283 = vperm.xlu0 %282, %v280
      %v284 = vpop.permute.xlu0 %283
      %v286 = vadd.f32 %v279, %v284
      %vm287 = vcmask 523264
      %288 = vst.msk [vmem:[%s250] sm:$0xff] %vm287, %v286
      %p289 = scmp.lt.s32.totalorder %s20, 1
      %s290 = scalar_select %p289, %s20, 1
      %p291 = scmp.lt.s32.totalorder %s21, 0
      %s292 = scalar_select %p291, %s21, 0
      %s293 = sadd.s32 %s292, %s290
      %s294 = smul.addr %s293, 8
      %s295 = scalar_lea.vmem %s5, %s294
      // Predicated region
      $region41: #{cnn_block_3d.3} parent=39 // pred_check
        %p296 = pneg %p160
      $region42: #{cnn_block_3d.3} parent=39 // pred_check_branch
        %298 = sbr.rel (%p296) target = $region44
      $region43: #{cnn_block_3d.3} parent=39 // pred_region
        _
      $region44: #{cnn_block_3d.3} parent=39 // pred_fallthru
        _
    $region40: #{cnn_block_3d.3} parent=5 // pred_fallthru
      _
    %p299 = scmp.le.s32.totalorder 2, %s11
    // Predicated region
    $region45: #{cnn_block_3d.3} parent=5 // pred_check
      %p300 = pneg %p299
    $region46: #{cnn_block_3d.3} parent=5 // pred_check_branch
      %302 = sbr.rel (%p300) target = $region48
    $region47: #{cnn_block_3d.3} parent=5 // pred_region
      %s303 = ssub.s32 %s11, 2
      // Predicated region
      $region49: #{cnn_block_3d.3} parent=47 // pred_check
        %p304 = pneg %p166
      $region50: #{cnn_block_3d.3} parent=47 // pred_check_branch
        %306 = sbr.rel (%p304) target = $region52
      $region51: #{cnn_block_3d.3} parent=47 // pred_region
        %p307 = scmp.lt.s32.totalorder %s22, 1
        %s308 = scalar_select %p307, %s22, 1
        %p309 = scmp.lt.s32.totalorder %s23, 0
        %s310 = scalar_select %p309, %s23, 0
        %s311 = sadd.s32 %s310, %s308
        %s312 = smul.addr %s311, 8
        %s313 = scalar_lea.vmem %s5, %s312
      $region52: #{cnn_block_3d.3} parent=47 // pred_fallthru
        _
    $region48: #{cnn_block_3d.3} parent=5 // pred_fallthru
      _
  $region6: #{cnn_block_3d.3} parent=0 // loop_footer
    %s15 = sadd.s32 1, %s11
  $region7: #{cnn_block_3d.3} parent=0 // loop_footer_branch
    %10 = sbr.rel target = $region3
  $region8: #{cnn_block_3d.3} parent=0 // loop_exit
    _

// kernel: cnn_block_3d.2
$region0: #{cnn_block_3d.2}
  #allocation0 [shape = 'u32[]', space=smem, size = 0x4, offset = 0x4, fixed_abs, tag = 'smem constant byte address 0x4 - core index']
  #allocation1 [shape = 'u32[144,128]{1,0:T(1,128)}', space=vmem, size = 0x12000, scoped, tag = 'internal scratch']
  %s0 = inlined_call_operand.vmem [shape: f32[2,256,64], index: 0, kind: input, shape index: {}]
  %s1 = inlined_call_operand.vmem [shape: f32[8,8,256], index: 1, kind: input, shape index: {}]
  %s2 = inlined_call_operand.vmem [shape: f32[8,1], index: 2, kind: input, shape index: {}]
  %s3 = inlined_call_operand.vmem [shape: f32[2,8,64], index: 3, kind: output, shape index: {0}]
  %s4 = inlined_call_operand.vmem [shape: f32[8,256], index: 4, kind: output, shape index: {1}]
  %s5 = inlined_call_operand.vmem [shape: f32[8,256], index: 5, kind: output, shape index: {2}]
  %6 = xla_tuple %s3, %s4, %s5
  %s7 = sld [smem:[#allocation0]]
  $region61: #{cnn_block_3d.2} parent=0
    _
  %s9 = ssub.s32 1, %s7
  %s10 = scalar_select 0, %s9, %s7
  loop: start=0, step=1, limit=4
  $region2: #{cnn_block_3d.2} parent=0 // loop_pre_header
    _
  $region3: #{cnn_block_3d.2} parent=0 // loop_header
    %s12 = sphi 0, %s16
    %p13 = scmp.ge.s32.totalorder %s12, 4
    %s19 = sphi 0, %s31
    %s20 = sphi 0, %s27
    %s21 = sphi 0, %s19
    %s22 = sphi 0, %s20
    %s23 = sphi 0, %s21
    %s24 = sphi 0, %s22
    %s36 = sphi 0, %s38
    %s39 = sphi 0, %s36
    %s40 = sphi 0, %s39
    %s56 = sphi 0, %s40
    %s60 = sphi 0, %s60
    %s62 = sphi 0, %s60
    %s63 = sphi 0, %s62
    %s77 = sphi 0, %s63
    %s81 = sphi 0, %s81
    %s83 = sphi 0, %s81
    %s84 = sphi 0, %s83
    %s98 = sphi 0, %s84
    %s106 = sphi 0, %s108
    %s109 = sphi 0, %s106
    %s110 = sphi 0, %s109
    %s126 = sphi 0, %s110
    %s134 = sphi 0, %s136
    %s137 = sphi 0, %s134
    %s138 = sphi 0, %s137
    %s154 = sphi 0, %s138
    %s162 = sphi 0, %s164
    %s165 = sphi 0, %s162
    %s166 = sphi 0, %s165
    %s182 = sphi 0, %s166
  $region4: #{cnn_block_3d.2} parent=0 // loop_header_branch
    %15 = sbr.rel (%p13) target = $region8
  $region5: #{cnn_block_3d.2} parent=0 // loop_body
    %s17 = ssub.s32 %s12, 1
    %s18 = ssub.s32 %s12, 2
    %s25 = sadd.s32 1, %s20
    %p26 = scmp.ge.s32.totalorder %s25, 1
    %s27 = scalar_select %p26, 0, %s25
    %s28 = sadd.s32 1, %s19
    %s29 = scalar_select %p26, %s28, %s19
    %p30 = scmp.ge.s32.totalorder %s29, 2
    %s31 = scalar_select %p30, 0, %s29
    %s32 = ssub.s32 %s19, %s31
    %s33 = ssub.s32 %s20, %s27
    %s34 = sor.u32 %s32, %s33
    %p35 = scmp.eq.s32.totalorder %s34, 0
    %s37 = sadd.s32 %s36, 1
    %s38 = scalar_select %p35, %s36, %s37
    %p41 = pneg %p35
    %p42 = scmp.eq.s32.totalorder %s12, 1
    %p43 = por %p41, %p42
    %p44 = scmp.ne.s32.totalorder %s36, %s39
    %p45 = scmp.eq.s32.totalorder %s12, 0
    %p46 = por %p44, %p45
    %p47 = scmp.ne.s32.totalorder %s36, %s39
    %p48 = scmp.eq.s32.totalorder %s17, 1
    %p49 = por %p47, %p48
    %p50 = scmp.ne.s32.totalorder %s39, %s40
    %p51 = scmp.eq.s32.totalorder %s17, 0
    %p52 = por %p50, %p51
    %p53 = scmp.ne.s32.totalorder %s39, %s40
    %p54 = scmp.eq.s32.totalorder %s18, 1
    %p55 = por %p53, %p54
    %p57 = scmp.ne.s32.totalorder %s40, %s56
    %p58 = scmp.eq.s32.totalorder %s18, 0
    %p59 = por %p57, %p58
    %s61 = sadd.s32 %s60, 1
    %p64 = scmp.eq.s32.totalorder %s12, 1
    %p65 = scmp.ne.s32.totalorder %s60, %s62
    %p66 = scmp.eq.s32.totalorder %s12, 0
    %p67 = por %p65, %p66
    %p68 = scmp.ne.s32.totalorder %s60, %s62
    %p69 = scmp.eq.s32.totalorder %s17, 1
    %p70 = por %p68, %p69
    %p71 = scmp.ne.s32.totalorder %s62, %s63
    %p72 = scmp.eq.s32.totalorder %s17, 0
    %p73 = por %p71, %p72
    %p74 = scmp.ne.s32.totalorder %s62, %s63
    %p75 = scmp.eq.s32.totalorder %s18, 1
    %p76 = por %p74, %p75
    %p78 = scmp.ne.s32.totalorder %s63, %s77
    %p79 = scmp.eq.s32.totalorder %s18, 0
    %p80 = por %p78, %p79
    %s82 = sadd.s32 %s81, 1
    %p85 = scmp.eq.s32.totalorder %s12, 1
    %p86 = scmp.ne.s32.totalorder %s81, %s83
    %p87 = scmp.eq.s32.totalorder %s12, 0
    %p88 = por %p86, %p87
    %p89 = scmp.ne.s32.totalorder %s81, %s83
    %p90 = scmp.eq.s32.totalorder %s17, 1
    %p91 = por %p89, %p90
    %p92 = scmp.ne.s32.totalorder %s83, %s84
    %p93 = scmp.eq.s32.totalorder %s17, 0
    %p94 = por %p92, %p93
    %p95 = scmp.ne.s32.totalorder %s83, %s84
    %p96 = scmp.eq.s32.totalorder %s18, 1
    %p97 = por %p95, %p96
    %p99 = scmp.ne.s32.totalorder %s84, %s98
    %p100 = scmp.eq.s32.totalorder %s18, 0
    %p101 = por %p99, %p100
    %s102 = ssub.s32 %s19, %s31
    %s103 = ssub.s32 %s20, %s27
    %s104 = sor.u32 %s102, %s103
    %p105 = scmp.eq.s32.totalorder %s104, 0
    %s107 = sadd.s32 %s106, 1
    %s108 = scalar_select %p105, %s106, %s107
    %p111 = pneg %p105
    %p112 = scmp.eq.s32.totalorder %s12, 1
    %p113 = por %p111, %p112
    %p114 = scmp.ne.s32.totalorder %s106, %s109
    %p115 = scmp.eq.s32.totalorder %s12, 0
    %p116 = por %p114, %p115
    %p117 = scmp.ne.s32.totalorder %s106, %s109
    %p118 = scmp.eq.s32.totalorder %s17, 1
    %p119 = por %p117, %p118
    %p120 = scmp.ne.s32.totalorder %s109, %s110
    %p121 = scmp.eq.s32.totalorder %s17, 0
    %p122 = por %p120, %p121
    %p123 = scmp.ne.s32.totalorder %s109, %s110
    %p124 = scmp.eq.s32.totalorder %s18, 1
    %p125 = por %p123, %p124
    %p127 = scmp.ne.s32.totalorder %s110, %s126
    %p128 = scmp.eq.s32.totalorder %s18, 0
    %p129 = por %p127, %p128
    %s130 = sadd.s32 %s19, %s20
    %s131 = sadd.s32 %s31, %s27
    %s132 = ssub.s32 %s130, %s131
    %p133 = scmp.eq.s32.totalorder %s132, 0
    %s135 = sadd.s32 %s134, 1
    %s136 = scalar_select %p133, %s134, %s135
    %p139 = pneg %p133
    %p140 = scmp.eq.s32.totalorder %s12, 1
    %p141 = por %p139, %p140
    %p142 = scmp.ne.s32.totalorder %s134, %s137
    %p143 = scmp.eq.s32.totalorder %s12, 0
    %p144 = por %p142, %p143
    %p145 = scmp.ne.s32.totalorder %s134, %s137
    %p146 = scmp.eq.s32.totalorder %s17, 1
    %p147 = por %p145, %p146
    %p148 = scmp.ne.s32.totalorder %s137, %s138
    %p149 = scmp.eq.s32.totalorder %s17, 0
    %p150 = por %p148, %p149
    %p151 = scmp.ne.s32.totalorder %s137, %s138
    %p152 = scmp.eq.s32.totalorder %s18, 1
    %p153 = por %p151, %p152
    %p155 = scmp.ne.s32.totalorder %s138, %s154
    %p156 = scmp.eq.s32.totalorder %s18, 0
    %p157 = por %p155, %p156
    %s158 = sadd.s32 %s19, %s20
    %s159 = sadd.s32 %s31, %s27
    %s160 = ssub.s32 %s158, %s159
    %p161 = scmp.eq.s32.totalorder %s160, 0
    %s163 = sadd.s32 %s162, 1
    %s164 = scalar_select %p161, %s162, %s163
    %p167 = pneg %p161
    %p168 = scmp.eq.s32.totalorder %s12, 1
    %p169 = por %p167, %p168
    %p170 = scmp.ne.s32.totalorder %s162, %s165
    %p171 = scmp.eq.s32.totalorder %s12, 0
    %p172 = por %p170, %p171
    %p173 = scmp.ne.s32.totalorder %s162, %s165
    %p174 = scmp.eq.s32.totalorder %s17, 1
    %p175 = por %p173, %p174
    %p176 = scmp.ne.s32.totalorder %s165, %s166
    %p177 = scmp.eq.s32.totalorder %s17, 0
    %p178 = por %p176, %p177
    %p179 = scmp.ne.s32.totalorder %s165, %s166
    %p180 = scmp.eq.s32.totalorder %s18, 1
    %p181 = por %p179, %p180
    %p183 = scmp.ne.s32.totalorder %s166, %s182
    %p184 = scmp.eq.s32.totalorder %s18, 0
    %p185 = por %p183, %p184
    %p186 = scmp.le.s32.totalorder 1, %s12
    %p187 = scmp.lt.s32.totalorder %s12, 3
    %p188 = pnand %p186, %p187
    %p189 = pneg %p188
    // Predicated region
    $region9: #{cnn_block_3d.2} parent=5 // pred_check
      _
    $region10: #{cnn_block_3d.2} parent=5 // pred_check_branch
      %191 = sbr.rel (%p188) target = $region12
    $region11: #{cnn_block_3d.2} parent=5 // pred_region
      %s192 = ssub.s32 %s12, 1
      // Predicated region
      $region13: #{cnn_block_3d.2} parent=11 // pred_check
        %p193 = pneg %p73
      $region14: #{cnn_block_3d.2} parent=11 // pred_check_branch
        %195 = sbr.rel (%p193) target = $region16
      $region15: #{cnn_block_3d.2} parent=11 // pred_region
        _
      $region16: #{cnn_block_3d.2} parent=11 // pred_fallthru
        _
      // Predicated region
      $region17: #{cnn_block_3d.2} parent=11 // pred_check
        %p196 = pneg %p94
      $region18: #{cnn_block_3d.2} parent=11 // pred_check_branch
        %198 = sbr.rel (%p196) target = $region20
      $region19: #{cnn_block_3d.2} parent=11 // pred_region
        _
      $region20: #{cnn_block_3d.2} parent=11 // pred_fallthru
        _
    $region12: #{cnn_block_3d.2} parent=5 // pred_fallthru
      _
    %p199 = scmp.lt.s32.totalorder %s12, 2
    // Predicated region
    $region21: #{cnn_block_3d.2} parent=5 // pred_check
      %p200 = pneg %p199
    $region22: #{cnn_block_3d.2} parent=5 // pred_check_branch
      %202 = sbr.rel (%p200) target = $region24
    $region23: #{cnn_block_3d.2} parent=5 // pred_region
      // Predicated region
      $region25: #{cnn_block_3d.2} parent=23 // pred_check
        %p203 = pneg %p46
      $region26: #{cnn_block_3d.2} parent=23 // pred_check_branch
        %205 = sbr.rel (%p203) target = $region28
      $region27: #{cnn_block_3d.2} parent=23 // pred_region
        %p206 = scmp.lt.s32.totalorder %s19, 1
        %s207 = scalar_select %p206, %s19, 1
        %p208 = scmp.lt.s32.totalorder %s20, 0
        %s209 = scalar_select %p208, %s20, 0
        %s210 = smul.addr %s207, 32
        %s211 = sadd.s32 %s209, %s210
        %s212 = smul.addr %s211, 8
        %s213 = scalar_lea.vmem %s0, %s212
      $region28: #{cnn_block_3d.2} parent=23 // pred_fallthru
        _
    $region24: #{cnn_block_3d.2} parent=5 // pred_fallthru
      _
    %p214 = scmp.le.s32.totalorder 1, %s12
    %p215 = scmp.lt.s32.totalorder %s12, 3
    %p216 = pnand %p214, %p215
    %p217 = pneg %p216
    // Predicated region
    $region29: #{cnn_block_3d.2} parent=5 // pred_check
      _
    $region30: #{cnn_block_3d.2} parent=5 // pred_check_branch
      %219 = sbr.rel (%p216) target = $region32
    $region31: #{cnn_block_3d.2} parent=5 // pred_region
      %s220 = ssub.s32 %s12, 1
      %p221 = scmp.lt.s32.totalorder %s21, 1
      %s222 = scalar_select %p221, %s21, 1
      %p223 = scmp.lt.s32.totalorder %s22, 0
      %s224 = scalar_select %p223, %s22, 0
      %s225 = smul.addr %s222, 32
      %s226 = sadd.s32 %s224, %s225
      %s227 = smul.addr %s226, 8
      %s228 = scalar_lea.vmem %s0, %s227
      %p229 = pneg %p52
      %p230 = pneg %p49
      %p231 = pneg %p73
      %p232 = pneg %p70
      %p233 = pneg %p94
      %p234 = pneg %p91
      %p235 = pneg %p122
      %p236 = pneg %p119
      %p237 = scmp.lt.s32.totalorder %s21, 1
      %s238 = scalar_select %p237, %s21, 1
      %p239 = scmp.lt.s32.totalorder %s22, 0
      %s240 = scalar_select %p239, %s22, 0
      %s241 = sadd.s32 %s240, %s238
      %s242 = smul.addr %s241, 8
      %s243 = scalar_lea.vmem %s3, %s242
      %p244 = pneg %p150
      %p245 = pneg %p147
      %s246 = sadd.s32 %s21, %s22
      %p247 = scmp.lt.s32.totalorder %s246, 1
      %s248 = scalar_select %p247, %s246, 1
      %s249 = smul.addr %s248, 8
      %s250 = scalar_lea.vmem %s4, %s249
      %p251 = pneg %p178
      %p252 = pneg %p175
      %s253 = sadd.s32 %s21, %s22
      %p254 = scmp.lt.s32.totalorder %s253, 1
      %s255 = scalar_select %p254, %s253, 1
      %s256 = smul.addr %s255, 8
      %s257 = scalar_lea.vmem %s5, %s256
      %p258 = scmp.lt.s32.totalorder %s21, 1
      %s259 = scalar_select %p258, %s21, 1
      %p260 = scmp.lt.s32.totalorder %s22, 0
      %s261 = scalar_select %p260, %s22, 0
      %s262 = smul.addr %s259, 32
      %s263 = sadd.s32 %s261, %s262
      %s264 = smul.addr %s263, 8
      %s265 = scalar_lea.vmem %s0, %s264
      %p266 = scmp.lt.s32.totalorder %s21, 1
      %s267 = scalar_select %p266, %s21, 1
      %p268 = scmp.lt.s32.totalorder %s22, 0
      %s269 = scalar_select %p268, %s22, 0
      %s270 = sadd.s32 %s269, %s267
      %s271 = smul.addr %s270, 8
      %s272 = scalar_lea.vmem %s3, %s271
      %s273 = sadd.s32 %s21, %s22
      %p274 = scmp.lt.s32.totalorder %s273, 1
      %s275 = scalar_select %p274, %s273, 1
      %s276 = smul.addr %s275, 8
      %s277 = scalar_lea.vmem %s4, %s276
      %s278 = sadd.s32 %s21, %s22
      %s279 = sadd.s32 %s21, %s22
      %p280 = scmp.lt.s32.totalorder %s279, 1
      %s281 = scalar_select %p280, %s279, 1
      %s282 = smul.addr %s281, 8
      %s283 = scalar_lea.vmem %s5, %s282
      %s284 = sadd.s32 %s21, %s22
      %v285 = vld [vmem:[%s265] sm:$0xff]
      %v286 = vld [vmem:[%s265 + $0x8] sm:$0xff]
      %v287 = vld [vmem:[%s265 + $0x10] sm:$0xff]
      %v288 = vld [vmem:[%s265 + $0x18] sm:$0xff]
      %v289 = vld [vmem:[%s265 + $0x20] sm:$0xff]
      %v290 = vld [vmem:[%s265 + $0x28] sm:$0xff]
      %v291 = vld [vmem:[%s265 + $0x30] sm:$0xff]
      %v292 = vld [vmem:[%s265 + $0x38] sm:$0xff]
      %v293 = vld [vmem:[%s265 + $0x40] sm:$0xff]
      %v294 = vld [vmem:[%s265 + $0x48] sm:$0xff]
      %v295 = vld [vmem:[%s265 + $0x50] sm:$0xff]
      %v296 = vld [vmem:[%s265 + $0x58] sm:$0xff]
      %v297 = vld [vmem:[%s265 + $0x60] sm:$0xff]
      %v298 = vld [vmem:[%s265 + $0x68] sm:$0xff]
      %v299 = vld [vmem:[%s265 + $0x70] sm:$0xff]
      %v300 = vld [vmem:[%s265 + $0x78] sm:$0xff]
      %v301 = vld [vmem:[%s265 + $0x80] sm:$0xff]
      %v302 = vld [vmem:[%s265 + $0x88] sm:$0xff]
      %v303 = vld [vmem:[%s265 + $0x90] sm:$0xff]
      %v304 = vld [vmem:[%s265 + $0x98] sm:$0xff]
      %v305 = vld [vmem:[%s265 + $0xa0] sm:$0xff]
      %v306 = vld [vmem:[%s265 + $0xa8] sm:$0xff]
      %v307 = vld [vmem:[%s265 + $0xb0] sm:$0xff]
      %v308 = vld [vmem:[%s265 + $0xb8] sm:$0xff]
      %v309 = vld [vmem:[%s265 + $0xc0] sm:$0xff]
      %v310 = vld [vmem:[%s265 + $0xc8] sm:$0xff]
      %v311 = vld [vmem:[%s265 + $0xd0] sm:$0xff]
      %v312 = vld [vmem:[%s265 + $0xd8] sm:$0xff]
      %v313 = vld [vmem:[%s265 + $0xe0] sm:$0xff]
      %v314 = vld [vmem:[%s265 + $0xe8] sm:$0xff]
      %v315 = vld [vmem:[%s265 + $0xf0] sm:$0xff]
      %v316 = vld [vmem:[%s265 + $0xf8] sm:$0xff]
      %v317 = vld [vmem:[%s1] sm:$0xff]
      %v318 = vld [vmem:[%s1 + $0x8] sm:$0xff]
      %319 = vmatprep.subr.mxu0 0.0
      %320 = vmatpush1.msra.mxu0 %v285
      %321 = vmatprep.subr.mxu0 0.0
      %322 = vmatpush1.msra.mxu0 %v286
      %323 = vmatprep.subr.mxu0 0.0
      %324 = vmatpush1.msra.mxu0 %v287
      %325 = vmatprep.subr.mxu0 0.0
      %326 = vmatpush1.msra.mxu0 %v288
      %327 = vmatprep.subr.mxu0 0.0
      %328 = vmatpush1.msra.mxu0 %v289
      %329 = vmatprep.subr.mxu0 0.0
      %330 = vmatpush1.msra.mxu0 %v290
      %331 = vmatprep.subr.mxu0 0.0
      %332 = vmatpush1.msra.mxu0 %v291
      %333 = vmatprep.subr.mxu0 0.0
      %334 = vmatpush1.msra.mxu0 %v292
      %335 = vmatprep.subr.mxu0 0.0
      %336 = vmatpush1.msra.mxu0 %v293
      %337 = vmatprep.subr.mxu0 0.0
      %338 = vmatpush1.msra.mxu0 %v294
      %339 = vmatprep.subr.mxu0 0.0
      %340 = vmatpush1.msra.mxu0 %v295
      %341 = vmatprep.subr.mxu0 0.0
      %342 = vmatpush1.msra.mxu0 %v296
      %343 = vmatprep.subr.mxu0 0.0
      %344 = vmatpush1.msra.mxu0 %v297
      %345 = vmatprep.subr.mxu0 0.0
      %346 = vmatpush1.msra.mxu0 %v298
      %347 = vmatprep.subr.mxu0 0.0
      %348 = vmatpush1.msra.mxu0 %v299
      %349 = vmatprep.subr.mxu0 0.0
      %350 = vmatpush1.msra.mxu0 %v300
      %351 = vmatprep.subr.mxu0 0.0
      %352 = vmatpush1.msra.mxu0 %v301
      %353 = vmatprep.subr.mxu0 0.0
      %354 = vmatpush1.msra.mxu0 %v302
      %355 = vmatprep.subr.mxu0 0.0
      %356 = vmatpush1.msra.mxu0 %v303
      %357 = vmatprep.subr.mxu0 0.0
      %358 = vmatpush1.msra.mxu0 %v304
      %359 = vmatprep.subr.mxu0 0.0
      %360 = vmatpush1.msra.mxu0 %v305
      %361 = vmatprep.subr.mxu0 0.0
      %362 = vmatpush1.msra.mxu0 %v306
      %363 = vmatprep.subr.mxu0 0.0
      %364 = vmatpush1.msra.mxu0 %v307
      %365 = vmatprep.subr.mxu0 0.0
      %366 = vmatpush1.msra.mxu0 %v308
      %367 = vmatprep.subr.mxu0 0.0
      %368 = vmatpush1.msra.mxu0 %v309
      %369 = vmatprep.subr.mxu0 0.0
      %370 = vmatpush1.msra.mxu0 %v310
      %371 = vmatprep.subr.mxu0 0.0
      %372 = vmatpush1.msra.mxu0 %v311
      %373 = vmatprep.subr.mxu0 0.0
      %374 = vmatpush1.msra.mxu0 %v312
      %375 = vmatprep.subr.mxu0 0.0
      %376 = vmatpush1.msra.mxu0 %v313
      %377 = vmatprep.subr.mxu0 0.0
      %378 = vmatpush1.msra.mxu0 %v314
      %379 = vmatprep.subr.mxu0 0.0
      %380 = vmatpush1.msra.mxu0 %v315
      %381 = vmatprep.subr.mxu0 0.0
      %382 = vmatpush1.msra.mxu0 %v316
      %383 = vmatprep.mubr.f32.mxu0 %v318
      %384 = vmatmul.mubr.f32.gmra.mrb[0].mxu0 %v317
      %v385 = vpop.f32.mrb[0].mxu0
      %v386 = vadd.f32 0.0, %v385
      %v387 = vpop.f32.mrb[0].mxu0
      %388 = vdwg.mxu0
      %s389 = scalar_lea.vmem %s1, 16
      %v390 = vld [vmem:[%s389] sm:$0xff]
      %v391 = vld [vmem:[%s389 + $0x8] sm:$0xff]
      %392 = vmatprep.subr.mxu0 0.0
      %393 = vmatpush1.msra.mxu0 %v285
      %394 = vmatprep.subr.mxu0 0.0
      %395 = vmatpush1.msra.mxu0 %v286
      %396 = vmatprep.subr.mxu0 0.0
      %397 = vmatpush1.msra.mxu0 %v287
      %398 = vmatprep.subr.mxu0 0.0
      %399 = vmatpush1.msra.mxu0 %v288
      %400 = vmatprep.subr.mxu0 0.0
      %401 = vmatpush1.msra.mxu0 %v289
      %402 = vmatprep.subr.mxu0 0.0
      %403 = vmatpush1.msra.mxu0 %v290
      %404 = vmatprep.subr.mxu0 0.0
      %405 = vmatpush1.msra.mxu0 %v291
      %406 = vmatprep.subr.mxu0 0.0
      %407 = vmatpush1.msra.mxu0 %v292
      %408 = vmatprep.subr.mxu0 0.0
      %409 = vmatpush1.msra.mxu0 %v293
      %410 = vmatprep.subr.mxu0 0.0
      %411 = vmatpush1.msra.mxu0 %v294
      %412 = vmatprep.subr.mxu0 0.0
      %413 = vmatpush1.msra.mxu0 %v295
      %414 = vmatprep.subr.mxu0 0.0
      %415 = vmatpush1.msra.mxu0 %v296
      %416 = vmatprep.subr.mxu0 0.0
      %417 = vmatpush1.msra.mxu0 %v297
      %418 = vmatprep.subr.mxu0 0.0
      %419 = vmatpush1.msra.mxu0 %v298
      %420 = vmatprep.subr.mxu0 0.0
      %421 = vmatpush1.msra.mxu0 %v299
      %422 = vmatprep.subr.mxu0 0.0
      %423 = vmatpush1.msra.mxu0 %v300
      %424 = vmatprep.subr.mxu0 0.0
      %425 = vmatpush1.msra.mxu0 %v301
      %426 = vmatprep.subr.mxu0 0.0
      %427 = vmatpush1.msra.mxu0 %v302
      %428 = vmatprep.subr.mxu0 0.0
      %429 = vmatpush1.msra.mxu0 %v303
      %430 = vmatprep.subr.mxu0 0.0
      %431 = vmatpush1.msra.mxu0 %v304
      %432 = vmatprep.subr.mxu0 0.0
      %433 = vmatpush1.msra.mxu0 %v305
      %434 = vmatprep.subr.mxu0 0.0
      %435 = vmatpush1.msra.mxu0 %v306
      %436 = vmatprep.subr.mxu0 0.0
      %437 = vmatpush1.msra.mxu0 %v307
      %438 = vmatprep.subr.mxu0 0.0
      %439 = vmatpush1.msra.mxu0 %v308
      %440 = vmatprep.subr.mxu0 0.0
      %441 = vmatpush1.msra.mxu0 %v309
      %442 = vmatprep.subr.mxu0 0.0
      %443 = vmatpush1.msra.mxu0 %v310
      %444 = vmatprep.subr.mxu0 0.0
      %445 = vmatpush1.msra.mxu0 %v311
      %446 = vmatprep.subr.mxu0 0.0
      %447 = vmatpush1.msra.mxu0 %v312
      %448 = vmatprep.subr.mxu0 0.0
      %449 = vmatpush1.msra.mxu0 %v313
      %450 = vmatprep.subr.mxu0 0.0
      %451 = vmatpush1.msra.mxu0 %v314
      %452 = vmatprep.subr.mxu0 0.0
      %453 = vmatpush1.msra.mxu0 %v315
      %454 = vmatprep.subr.mxu0 0.0
      %455 = vmatpush1.msra.mxu0 %v316
      %456 = vmatprep.mubr.f32.mxu0 %v391
      %457 = vmatmul.mubr.f32.gmra.mrb[0].mxu0 %v390
      %v458 = vpop.f32.mrb[0].mxu0
      %v459 = vadd.f32 0.0, %v458
      %v460 = vpop.f32.mrb[0].mxu0
      %461 = vdwg.mxu0
      %v462 = vmax.f32 %v386, %v459
      %s463 = scalar_lea.vmem %s1, 32
      %v464 = vld [vmem:[%s463] sm:$0xff]
      %v465 = vld [vmem:[%s463 + $0x8] sm:$0xff]
      %466 = vmatprep.subr.mxu0 0.0
      %467 = vmatpush1.msra.mxu0 %v285
      %468 = vmatprep.subr.mxu0 0.0
      %469 = vmatpush1.msra.mxu0 %v286
      %470 = vmatprep.subr.mxu0 0.0
      %471 = vmatpush1.msra.mxu0 %v287
      %472 = vmatprep.subr.mxu0 0.0
      %473 = vmatpush1.msra.mxu0 %v288
      %474 = vmatprep.subr.mxu0 0.0
      %475 = vmatpush1.msra.mxu0 %v289
      %476 = vmatprep.subr.mxu0 0.0
      %477 = vmatpush1.msra.mxu0 %v290
      %478 = vmatprep.subr.mxu0 0.0
      %479 = vmatpush1.msra.mxu0 %v291
      %480 = vmatprep.subr.mxu0 0.0
      %481 = vmatpush1.msra.mxu0 %v292
      %482 = vmatprep.subr.mxu0 0.0
      %483 = vmatpush1.msra.mxu0 %v293
      %484 = vmatprep.subr.mxu0 0.0
      %485 = vmatpush1.msra.mxu0 %v294
      %486 = vmatprep.subr.mxu0 0.0
      %487 = vmatpush1.msra.mxu0 %v295
      %488 = vmatprep.subr.mxu0 0.0
      %489 = vmatpush1.msra.mxu0 %v296
      %490 = vmatprep.subr.mxu0 0.0
      %491 = vmatpush1.msra.mxu0 %v297
      %492 = vmatprep.subr.mxu0 0.0
      %493 = vmatpush1.msra.mxu0 %v298
      %494 = vmatprep.subr.mxu0 0.0
      %495 = vmatpush1.msra.mxu0 %v299
      %496 = vmatprep.subr.mxu0 0.0
      %497 = vmatpush1.msra.mxu0 %v300
      %498 = vmatprep.subr.mxu0 0.0
      %499 = vmatpush1.msra.mxu0 %v301
      %500 = vmatprep.subr.mxu0 0.0
      %501 = vmatpush1.msra.mxu0 %v302
      %502 = vmatprep.subr.mxu0 0.0
      %503 = vmatpush1.msra.mxu0 %v303
      %504 = vmatprep.subr.mxu0 0.0
      %505 = vmatpush1.msra.mxu0 %v304
      %506 = vmatprep.subr.mxu0 0.0
      %507 = vmatpush1.msra.mxu0 %v305
      %508 = vmatprep.subr.mxu0 0.0
      %509 = vmatpush1.msra.mxu0 %v306
      %510 = vmatprep.subr.mxu0 0.0
      %511 = vmatpush1.msra.mxu0 %v307
      %512 = vmatprep.subr.mxu0 0.0
      %513 = vmatpush1.msra.mxu0 %v308
      %514 = vmatprep.subr.mxu0 0.0
      %515 = vmatpush1.msra.mxu0 %v309
      %516 = vmatprep.subr.mxu0 0.0
      %517 = vmatpush1.msra.mxu0 %v310
      %518 = vmatprep.subr.mxu0 0.0
      %519 = vmatpush1.msra.mxu0 %v311
      %520 = vmatprep.subr.mxu0 0.0
      %521 = vmatpush1.msra.mxu0 %v312
      %522 = vmatprep.subr.mxu0 0.0
      %523 = vmatpush1.msra.mxu0 %v313
      %524 = vmatprep.subr.mxu0 0.0
      %525 = vmatpush1.msra.mxu0 %v314
      %526 = vmatprep.subr.mxu0 0.0
      %527 = vmatpush1.msra.mxu0 %v315
      %528 = vmatprep.subr.mxu0 0.0
      %529 = vmatpush1.msra.mxu0 %v316
      %530 = vmatprep.mubr.f32.mxu0 %v465
      %531 = vmatmul.mubr.f32.gmra.mrb[0].mxu0 %v464
      %v532 = vpop.f32.mrb[0].mxu0
      %v533 = vadd.f32 0.0, %v532
      %v534 = vpop.f32.mrb[0].mxu0
      %535 = vdwg.mxu0
      %v536 = vmax.f32 %v462, %v533
      %s537 = scalar_lea.vmem %s1, 48
      %v538 = vld [vmem:[%s537] sm:$0xff]
      %v539 = vld [vmem:[%s537 + $0x8] sm:$0xff]
      %540 = vmatprep.subr.mxu0 0.0
      %541 = vmatpush1.msra.mxu0 %v285
      %542 = vmatprep.subr.mxu0 0.0
      %543 = vmatpush1.msra.mxu0 %v286
      %544 = vmatprep.subr.mxu0 0.0
      %545 = vmatpush1.msra.mxu0 %v287
      %546 = vmatprep.subr.mxu0 0.0
      %547 = vmatpush1.msra.mxu0 %v288
      %548 = vmatprep.subr.mxu0 0.0
      %549 = vmatpush1.msra.mxu0 %v289
      %550 = vmatprep.subr.mxu0 0.0
      %551 = vmatpush1.msra.mxu0 %v290
      %552 = vmatprep.subr.mxu0 0.0
      %553 = vmatpush1.msra.mxu0 %v291
      %554 = vmatprep.subr.mxu0 0.0
      %555 = vmatpush1.msra.mxu0 %v292
      %556 = vmatprep.subr.mxu0 0.0
      %557 = vmatpush1.msra.mxu0 %v293
      %558 = vmatprep.subr.mxu0 0.0
      %559 = vmatpush1.msra.mxu0 %v294
      %560 = vmatprep.subr.mxu0 0.0
      %561 = vmatpush1.msra.mxu0 %v295
      %562 = vmatprep.subr.mxu0 0.0
      %563 = vmatpush1.msra.mxu0 %v296
      %564 = vmatprep.subr.mxu0 0.0
      %565 = vmatpush1.msra.mxu0 %v297
      %566 = vmatprep.subr.mxu0 0.0
      %567 = vmatpush1.msra.mxu0 %v298
      %568 = vmatprep.subr.mxu0 0.0
      %569 = vmatpush1.msra.mxu0 %v299
      %570 = vmatprep.subr.mxu0 0.0
      %571 = vmatpush1.msra.mxu0 %v300
      %572 = vmatprep.subr.mxu0 0.0
      %573 = vmatpush1.msra.mxu0 %v301
      %574 = vmatprep.subr.mxu0 0.0
      %575 = vmatpush1.msra.mxu0 %v302
      %576 = vmatprep.subr.mxu0 0.0
      %577 = vmatpush1.msra.mxu0 %v303
      %578 = vmatprep.subr.mxu0 0.0
      %579 = vmatpush1.msra.mxu0 %v304
      %580 = vmatprep.subr.mxu0 0.0
      %581 = vmatpush1.msra.mxu0 %v305
      %582 = vmatprep.subr.mxu0 0.0
      %583 = vmatpush1.msra.mxu0 %v306
      %584 = vmatprep.subr.mxu0 0.0
      %585 = vmatpush1.msra.mxu0 %v307
      %586 = vmatprep.subr.mxu0 0.0
      %587 = vmatpush1.msra.mxu0 %v308
      %588 = vmatprep.subr.mxu0 0.0
      %589 = vmatpush1.msra.mxu0 %v309
      %590 = vmatprep.subr.mxu0 0.0
      %591 = vmatpush1.msra.mxu0 %v310
      %592 = vmatprep.subr.mxu0 0.0
      %593 = vmatpush1.msra.mxu0 %v311
      %594 = vmatprep.subr.mxu0 0.0
      %595 = vmatpush1.msra.mxu0 %v312
      %596 = vmatprep.subr.mxu0 0.0
      %597 = vmatpush1.msra.mxu0 %v313
      %598 = vmatprep.subr.mxu0 0.0
      %599 = vmatpush1.msra.mxu0 %v314
      %600 = vmatprep.subr.mxu0 0.0
      %601 = vmatpush1.msra.mxu0 %v315
      %602 = vmatprep.subr.mxu0 0.0
      %603 = vmatpush1.msra.mxu0 %v316
      %604 = vmatprep.mubr.f32.mxu0 %v539
      %605 = vmatmul.mubr.f32.gmra.mrb[0].mxu0 %v538
      %v606 = vpop.f32.mrb[0].mxu0
      %v607 = vadd.f32 0.0, %v606
      %v608 = vpop.f32.mrb[0].mxu0
      %609 = vdwg.mxu0
      %v610 = vmax.f32 %v536, %v607
      %s611 = scalar_lea.vmem %s1, 64
      %v612 = vld [vmem:[%s611] sm:$0xff]
      %v613 = vld [vmem:[%s611 + $0x8] sm:$0xff]
      %614 = vmatprep.subr.mxu0 0.0
      %615 = vmatpush1.msra.mxu0 %v285
      %616 = vmatprep.subr.mxu0 0.0
      %617 = vmatpush1.msra.mxu0 %v286
      %618 = vmatprep.subr.mxu0 0.0
      %619 = vmatpush1.msra.mxu0 %v287
      %620 = vmatprep.subr.mxu0 0.0
      %621 = vmatpush1.msra.mxu0 %v288
      %622 = vmatprep.subr.mxu0 0.0
      %623 = vmatpush1.msra.mxu0 %v289
      %624 = vmatprep.subr.mxu0 0.0
      %625 = vmatpush1.msra.mxu0 %v290
      %626 = vmatprep.subr.mxu0 0.0
      %627 = vmatpush1.msra.mxu0 %v291
      %628 = vmatprep.subr.mxu0 0.0
      %629 = vmatpush1.msra.mxu0 %v292
      %630 = vmatprep.subr.mxu0 0.0
      %631 = vmatpush1.msra.mxu0 %v293
      %632 = vmatprep.subr.mxu0 0.0
      %633 = vmatpush1.msra.mxu0 %v294
      %634 = vmatprep.subr.mxu0 0.0
      %635 = vmatpush1.msra.mxu0 %v295
      %636 = vmatprep.subr.mxu0 0.0
      %637 = vmatpush1.msra.mxu0 %v296
      %638 = vmatprep.subr.mxu0 0.0
      %639 = vmatpush1.msra.mxu0 %v297
      %640 = vmatprep.subr.mxu0 0.0
      %641 = vmatpush1.msra.mxu0 %v298
      %642 = vmatprep.subr.mxu0 0.0
      %643 = vmatpush1.msra.mxu0 %v299
      %644 = vmatprep.subr.mxu0 0.0
      %645 = vmatpush1.msra.mxu0 %v300
      %646 = vmatprep.subr.mxu0 0.0
      %647 = vmatpush1.msra.mxu0 %v301
      %648 = vmatprep.subr.mxu0 0.0
      %649 = vmatpush1.msra.mxu0 %v302
      %650 = vmatprep.subr.mxu0 0.0
      %651 = vmatpush1.msra.mxu0 %v303
      %652 = vmatprep.subr.mxu0 0.0
      %653 = vmatpush1.msra.mxu0 %v304
      %654 = vmatprep.subr.mxu0 0.0
      %655 = vmatpush1.msra.mxu0 %v305
      %656 = vmatprep.subr.mxu0 0.0
      %657 = vmatpush1.msra.mxu0 %v306
      %658 = vmatprep.subr.mxu0 0.0
      %659 = vmatpush1.msra.mxu0 %v307
      %660 = vmatprep.subr.mxu0 0.0
      %661 = vmatpush1.msra.mxu0 %v308
      %662 = vmatprep.subr.mxu0 0.0
      %663 = vmatpush1.msra.mxu0 %v309
      %664 = vmatprep.subr.mxu0 0.0
      %665 = vmatpush1.msra.mxu0 %v310
      %666 = vmatprep.subr.mxu0 0.0
      %667 = vmatpush1.msra.mxu0 %v311
      %668 = vmatprep.subr.mxu0 0.0
      %669 = vmatpush1.msra.mxu0 %v312
      %670 = vmatprep.subr.mxu0 0.0
      %671 = vmatpush1.msra.mxu0 %v313
      %672 = vmatprep.subr.mxu0 0.0
      %673 = vmatpush1.msra.mxu0 %v314
      %674 = vmatprep.subr.mxu0 0.0
      %675 = vmatpush1.msra.mxu0 %v315
      %676 = vmatprep.subr.mxu0 0.0
      %677 = vmatpush1.msra.mxu0 %v316
      %678 = vmatprep.mubr.f32.mxu0 %v613
      %679 = vmatmul.mubr.f32.gmra.mrb[0].mxu0 %v612
      %v680 = vpop.f32.mrb[0].mxu0
      %v681 = vadd.f32 0.0, %v680
      %v682 = vpop.f32.mrb[0].mxu0
      %683 = vdwg.mxu0
      %v684 = vmax.f32 %v610, %v681
      %s685 = scalar_lea.vmem %s1, 80
      %v686 = vld [vmem:[%s685] sm:$0xff]
      %v687 = vld [vmem:[%s685 + $0x8] sm:$0xff]
      %688 = vmatprep.subr.mxu0 0.0
      %689 = vmatpush1.msra.mxu0 %v285
      %690 = vmatprep.subr.mxu0 0.0
      %691 = vmatpush1.msra.mxu0 %v286
      %692 = vmatprep.subr.mxu0 0.0
      %693 = vmatpush1.msra.mxu0 %v287
      %694 = vmatprep.subr.mxu0 0.0
      %695 = vmatpush1.msra.mxu0 %v288
      %696 = vmatprep.subr.mxu0 0.0
      %697 = vmatpush1.msra.mxu0 %v289
      %698 = vmatprep.subr.mxu0 0.0
      %699 = vmatpush1.msra.mxu0 %v290
      %700 = vmatprep.subr.mxu0 0.0
      %701 = vmatpush1.msra.mxu0 %v291
      %702 = vmatprep.subr.mxu0 0.0
      %703 = vmatpush1.msra.mxu0 %v292
      %704 = vmatprep.subr.mxu0 0.0
      %705 = vmatpush1.msra.mxu0 %v293
      %706 = vmatprep.subr.mxu0 0.0
      %707 = vmatpush1.msra.mxu0 %v294
      %708 = vmatprep.subr.mxu0 0.0
      %709 = vmatpush1.msra.mxu0 %v295
      %710 = vmatprep.subr.mxu0 0.0
      %711 = vmatpush1.msra.mxu0 %v296
      %712 = vmatprep.subr.mxu0 0.0
      %713 = vmatpush1.msra.mxu0 %v297
      %714 = vmatprep.subr.mxu0 0.0
      %715 = vmatpush1.msra.mxu0 %v298
      %716 = vmatprep.subr.mxu0 0.0
      %717 = vmatpush1.msra.mxu0 %v299
      %718 = vmatprep.subr.mxu0 0.0
      %719 = vmatpush1.msra.mxu0 %v300
      %720 = vmatprep.subr.mxu0 0.0
      %721 = vmatpush1.msra.mxu0 %v301
      %722 = vmatprep.subr.mxu0 0.0
      %723 = vmatpush1.msra.mxu0 %v302
      %724 = vmatprep.subr.mxu0 0.0
      %725 = vmatpush1.msra.mxu0 %v303
      %726 = vmatprep.subr.mxu0 0.0
      %727 = vmatpush1.msra.mxu0 %v304
      %728 = vmatprep.subr.mxu0 0.0
      %729 = vmatpush1.msra.mxu0 %v305
      %730 = vmatprep.subr.mxu0 0.0
      %731 = vmatpush1.msra.mxu0 %v306
      %732 = vmatprep.subr.mxu0 0.0
      %733 = vmatpush1.msra.mxu0 %v307
      %734 = vmatprep.subr.mxu0 0.0
      %735 = vmatpush1.msra.mxu0 %v308
      %736 = vmatprep.subr.mxu0 0.0
      %737 = vmatpush1.msra.mxu0 %v309
      %738 = vmatprep.subr.mxu0 0.0
      %739 = vmatpush1.msra.mxu0 %v310
      %740 = vmatprep.subr.mxu0 0.0
      %741 = vmatpush1.msra.mxu0 %v311
      %742 = vmatprep.subr.mxu0 0.0
      %743 = vmatpush1.msra.mxu0 %v312
      %744 = vmatprep.subr.mxu0 0.0
      %745 = vmatpush1.msra.mxu0 %v313
      %746 = vmatprep.subr.mxu0 0.0
      %747 = vmatpush1.msra.mxu0 %v314
      %748 = vmatprep.subr.mxu0 0.0
      %749 = vmatpush1.msra.mxu0 %v315
      %750 = vmatprep.subr.mxu0 0.0
      %751 = vmatpush1.msra.mxu0 %v316
      %752 = vmatprep.mubr.f32.mxu0 %v687
      %753 = vmatmul.mubr.f32.gmra.mrb[0].mxu0 %v686
      %v754 = vpop.f32.mrb[0].mxu0
      %v755 = vadd.f32 0.0, %v754
      %v756 = vpop.f32.mrb[0].mxu0
      %757 = vdwg.mxu0
      %v758 = vmax.f32 %v684, %v755
      %s759 = scalar_lea.vmem %s1, 96
      %v760 = vld [vmem:[%s759] sm:$0xff]
      %v761 = vld [vmem:[%s759 + $0x8] sm:$0xff]
      %762 = vmatprep.subr.mxu0 0.0
      %763 = vmatpush1.msra.mxu0 %v285
      %764 = vmatprep.subr.mxu0 0.0
      %765 = vmatpush1.msra.mxu0 %v286
      %766 = vmatprep.subr.mxu0 0.0
      %767 = vmatpush1.msra.mxu0 %v287
      %768 = vmatprep.subr.mxu0 0.0
      %769 = vmatpush1.msra.mxu0 %v288
      %770 = vmatprep.subr.mxu0 0.0
      %771 = vmatpush1.msra.mxu0 %v289
      %772 = vmatprep.subr.mxu0 0.0
      %773 = vmatpush1.msra.mxu0 %v290
      %774 = vmatprep.subr.mxu0 0.0
      %775 = vmatpush1.msra.mxu0 %v291
      %776 = vmatprep.subr.mxu0 0.0
      %777 = vmatpush1.msra.mxu0 %v292
      %778 = vmatprep.subr.mxu0 0.0
      %779 = vmatpush1.msra.mxu0 %v293
      %780 = vmatprep.subr.mxu0 0.0
      %781 = vmatpush1.msra.mxu0 %v294
      %782 = vmatprep.subr.mxu0 0.0
      %783 = vmatpush1.msra.mxu0 %v295
      %784 = vmatprep.subr.mxu0 0.0
      %785 = vmatpush1.msra.mxu0 %v296
      %786 = vmatprep.subr.mxu0 0.0
      %787 = vmatpush1.msra.mxu0 %v297
      %788 = vmatprep.subr.mxu0 0.0
      %789 = vmatpush1.msra.mxu0 %v298
      %790 = vmatprep.subr.mxu0 0.0
      %791 = vmatpush1.msra.mxu0 %v299
      %792 = vmatprep.subr.mxu0 0.0
      %793 = vmatpush1.msra.mxu0 %v300
      %794 = vmatprep.subr.mxu0 0.0
      %795 = vmatpush1.msra.mxu0 %v301
      %796 = vmatprep.subr.mxu0 0.0
      %797 = vmatpush1.msra.mxu0 %v302
      %798 = vmatprep.subr.mxu0 0.0
      %799 = vmatpush1.msra.mxu0 %v303
      %800 = vmatprep.subr.mxu0 0.0
      %801 = vmatpush1.msra.mxu0 %v304
      %802 = vmatprep.subr.mxu0 0.0
      %803 = vmatpush1.msra.mxu0 %v305
      %804 = vmatprep.subr.mxu0 0.0
      %805 = vmatpush1.msra.mxu0 %v306
      %806 = vmatprep.subr.mxu0 0.0
      %807 = vmatpush1.msra.mxu0 %v307
      %808 = vmatprep.subr.mxu0 0.0
      %809 = vmatpush1.msra.mxu0 %v308
      %810 = vmatprep.subr.mxu0 0.0
      %811 = vmatpush1.msra.mxu0 %v309
      %812 = vmatprep.subr.mxu0 0.0
      %813 = vmatpush1.msra.mxu0 %v310
      %814 = vmatprep.subr.mxu0 0.0
      %815 = vmatpush1.msra.mxu0 %v311
      %816 = vmatprep.subr.mxu0 0.0
      %817 = vmatpush1.msra.mxu0 %v312
      %818 = vmatprep.subr.mxu0 0.0
      %819 = vmatpush1.msra.mxu0 %v313
      %820 = vmatprep.subr.mxu0 0.0
      %821 = vmatpush1.msra.mxu0 %v314
      %822 = vmatprep.subr.mxu0 0.0
      %823 = vmatpush1.msra.mxu0 %v315
      %824 = vmatprep.subr.mxu0 0.0
      %825 = vmatpush1.msra.mxu0 %v316
      %826 = vmatprep.mubr.f32.mxu0 %v761
      %827 = vmatmul.mubr.f32.gmra.mrb[0].mxu0 %v760
      %v828 = vpop.f32.mrb[0].mxu0
      %v829 = vadd.f32 0.0, %v828
      %v830 = vpop.f32.mrb[0].mxu0
      %831 = vdwg.mxu0
      %v832 = vmax.f32 %v758, %v829
      %s833 = scalar_lea.vmem %s1, 112
      %v834 = vld [vmem:[%s833] sm:$0xff]
      %v835 = vld [vmem:[%s833 + $0x8] sm:$0xff]
      %836 = vmatprep.subr.mxu0 0.0
      %837 = vmatpush1.msra.mxu0 %v285
      %838 = vmatprep.subr.mxu0 0.0
      %839 = vmatpush1.msra.mxu0 %v286
      %840 = vmatprep.subr.mxu0 0.0
      %841 = vmatpush1.msra.mxu0 %v287
      %842 = vmatprep.subr.mxu0 0.0
      %843 = vmatpush1.msra.mxu0 %v288
      %844 = vmatprep.subr.mxu0 0.0
      %845 = vmatpush1.msra.mxu0 %v289
      %846 = vmatprep.subr.mxu0 0.0
      %847 = vmatpush1.msra.mxu0 %v290
      %848 = vmatprep.subr.mxu0 0.0
      %849 = vmatpush1.msra.mxu0 %v291
      %850 = vmatprep.subr.mxu0 0.0
      %851 = vmatpush1.msra.mxu0 %v292
      %852 = vmatprep.subr.mxu0 0.0
      %853 = vmatpush1.msra.mxu0 %v293
      %854 = vmatprep.subr.mxu0 0.0
      %855 = vmatpush1.msra.mxu0 %v294
      %856 = vmatprep.subr.mxu0 0.0
      %857 = vmatpush1.msra.mxu0 %v295
      %858 = vmatprep.subr.mxu0 0.0
      %859 = vmatpush1.msra.mxu0 %v296
      %860 = vmatprep.subr.mxu0 0.0
      %861 = vmatpush1.msra.mxu0 %v297
      %862 = vmatprep.subr.mxu0 0.0
      %863 = vmatpush1.msra.mxu0 %v298
      %864 = vmatprep.subr.mxu0 0.0
      %865 = vmatpush1.msra.mxu0 %v299
      %866 = vmatprep.subr.mxu0 0.0
      %867 = vmatpush1.msra.mxu0 %v300
      %868 = vmatprep.subr.mxu0 0.0
      %869 = vmatpush1.msra.mxu0 %v301
      %870 = vmatprep.subr.mxu0 0.0
      %871 = vmatpush1.msra.mxu0 %v302
      %872 = vmatprep.subr.mxu0 0.0
      %873 = vmatpush1.msra.mxu0 %v303
      %874 = vmatprep.subr.mxu0 0.0
      %875 = vmatpush1.msra.mxu0 %v304
      %876 = vmatprep.subr.mxu0 0.0
      %877 = vmatpush1.msra.mxu0 %v305
      %878 = vmatprep.subr.mxu0 0.0
      %879 = vmatpush1.msra.mxu0 %v306
      %880 = vmatprep.subr.mxu0 0.0
      %881 = vmatpush1.msra.mxu0 %v307
      %882 = vmatprep.subr.mxu0 0.0
      %883 = vmatpush1.msra.mxu0 %v308
      %884 = vmatprep.subr.mxu0 0.0
      %885 = vmatpush1.msra.mxu0 %v309
      %886 = vmatprep.subr.mxu0 0.0
      %887 = vmatpush1.msra.mxu0 %v310
      %888 = vmatprep.subr.mxu0 0.0
      %889 = vmatpush1.msra.mxu0 %v311
      %890 = vmatprep.subr.mxu0 0.0
      %891 = vmatpush1.msra.mxu0 %v312
      %892 = vmatprep.subr.mxu0 0.0
      %893 = vmatpush1.msra.mxu0 %v313
      %894 = vmatprep.subr.mxu0 0.0
      %895 = vmatpush1.msra.mxu0 %v314
      %896 = vmatprep.subr.mxu0 0.0
      %897 = vmatpush1.msra.mxu0 %v315
      %898 = vmatprep.subr.mxu0 0.0
      %899 = vmatpush1.msra.mxu0 %v316
      %900 = vmatprep.mubr.f32.mxu0 %v835
      %901 = vmatmul.mubr.f32.gmra.mrb[0].mxu0 %v834
      %v902 = vpop.f32.mrb[0].mxu0
      %v903 = vadd.f32 0.0, %v902
      %v904 = vpop.f32.mrb[0].mxu0
      %905 = vdwg.mxu0
      %v906 = vmax.f32 %v832, %v903
      %v907 = vld [vmem:[%s2] sm:$0xff]
      %909 = vset.pattern.permute.xlu0 0
      %910 = vperm.xlu0 %909, %v907
      %v911 = vpop.permute.xlu0 %910
      %v913 = vadd.f32 %v906, %v911
      %v914 = vmax.f32 %v913, 0.0
      %vm915 = vcmask 523264
      %916 = vst.msk [vmem:[%s272] sm:$0xff] %vm915, %v914
      %v917 = vsel %vm915, %v914, 0.0
      %918 = vadd.xlane.f32.xlu0 %v917
      %v919 = vpop.xlane.xlu0 %918
      %v920 = vmul.f32 %v914, %v914
      %v921 = vsel %vm915, %v920, 0.0
      %922 = vadd.xlane.f32.xlu0 %v921
      %v923 = vpop.xlane.xlu0 %922
      %924 = vst [vmem:[%s277] sm:$0xff] %v919
      %925 = vst [vmem:[%s283] sm:$0xff] %v923
      %p926 = scmp.lt.s32.totalorder %s21, 1
      %s927 = scalar_select %p926, %s21, 1
      %p928 = scmp.lt.s32.totalorder %s22, 0
      %s929 = scalar_select %p928, %s22, 0
      %s930 = sadd.s32 %s929, %s927
      %s931 = smul.addr %s930, 8
      %s932 = scalar_lea.vmem %s3, %s931
      %s933 = sadd.s32 %s21, %s22
      %p934 = scmp.lt.s32.totalorder %s933, 1
      %s935 = scalar_select %p934, %s933, 1
      %s936 = smul.addr %s935, 8
      %s937 = scalar_lea.vmem %s4, %s936
      %s938 = sadd.s32 %s21, %s22
      %p939 = scmp.lt.s32.totalorder %s938, 1
      %s940 = scalar_select %p939, %s938, 1
      %s941 = smul.addr %s940, 8
      %s942 = scalar_lea.vmem %s5, %s941
      // Predicated region
      $region33: #{cnn_block_3d.2} parent=31 // pred_check
        %p943 = pneg %p119
      $region34: #{cnn_block_3d.2} parent=31 // pred_check_branch
        %945 = sbr.rel (%p943) target = $region36
      $region35: #{cnn_block_3d.2} parent=31 // pred_region
        _
      $region36: #{cnn_block_3d.2} parent=31 // pred_fallthru
        _
      // Predicated region
      $region37: #{cnn_block_3d.2} parent=31 // pred_check
        %p946 = pneg %p147
      $region38: #{cnn_block_3d.2} parent=31 // pred_check_branch
        %948 = sbr.rel (%p946) target = $region40
      $region39: #{cnn_block_3d.2} parent=31 // pred_region
        %s949 = sadd.s32 %s21, %s22
      $region40: #{cnn_block_3d.2} parent=31 // pred_fallthru
        _
      // Predicated region
      $region41: #{cnn_block_3d.2} parent=31 // pred_check
        %p950 = pneg %p175
      $region42: #{cnn_block_3d.2} parent=31 // pred_check_branch
        %952 = sbr.rel (%p950) target = $region44
      $region43: #{cnn_block_3d.2} parent=31 // pred_region
        %s953 = sadd.s32 %s21, %s22
      $region44: #{cnn_block_3d.2} parent=31 // pred_fallthru
        _
    $region32: #{cnn_block_3d.2} parent=5 // pred_fallthru
      _
    %p954 = scmp.le.s32.totalorder 2, %s12
    // Predicated region
    $region45: #{cnn_block_3d.2} parent=5 // pred_check
      %p955 = pneg %p954
    $region46: #{cnn_block_3d.2} parent=5 // pred_check_branch
      %957 = sbr.rel (%p955) target = $region48
    $region47: #{cnn_block_3d.2} parent=5 // pred_region
      %s958 = ssub.s32 %s12, 2
      // Predicated region
      $region49: #{cnn_block_3d.2} parent=47 // pred_check
        %p959 = pneg %p125
      $region50: #{cnn_block_3d.2} parent=47 // pred_check_branch
        %961 = sbr.rel (%p959) target = $region52
      $region51: #{cnn_block_3d.2} parent=47 // pred_region
        %p962 = scmp.lt.s32.totalorder %s23, 1
        %s963 = scalar_select %p962, %s23, 1
        %p964 = scmp.lt.s32.totalorder %s24, 0
        %s965 = scalar_select %p964, %s24, 0
        %s966 = sadd.s32 %s965, %s963
        %s967 = smul.addr %s966, 8
        %s968 = scalar_lea.vmem %s3, %s967
      $region52: #{cnn_block_3d.2} parent=47 // pred_fallthru
        _
      // Predicated region
      $region53: #{cnn_block_3d.2} parent=47 // pred_check
        %p969 = pneg %p153
      $region54: #{cnn_block_3d.2} parent=47 // pred_check_branch
        %971 = sbr.rel (%p969) target = $region56
      $region55: #{cnn_block_3d.2} parent=47 // pred_region
        %s972 = sadd.s32 %s23, %s24
        %p973 = scmp.lt.s32.totalorder %s972, 1
        %s974 = scalar_select %p973, %s972, 1
        %s975 = smul.addr %s974, 8
        %s976 = scalar_lea.vmem %s4, %s975
      $region56: #{cnn_block_3d.2} parent=47 // pred_fallthru
        _
      // Predicated region
      $region57: #{cnn_block_3d.2} parent=47 // pred_check
        %p977 = pneg %p181
      $region58: #{cnn_block_3d.2} parent=47 // pred_check_branch
        %979 = sbr.rel (%p977) target = $region60
      $region59: #{cnn_block_3d.2} parent=47 // pred_region
        %s980 = sadd.s32 %s23, %s24
        %p981 = scmp.lt.s32.totalorder %s980, 1
        %s982 = scalar_select %p981, %s980, 1
        %s983 = smul.addr %s982, 8
        %s984 = scalar_lea.vmem %s5, %s983
      $region60: #{cnn_block_3d.2} parent=47 // pred_fallthru
        _
    $region48: #{cnn_block_3d.2} parent=5 // pred_fallthru
      _
  $region6: #{cnn_block_3d.2} parent=0 // loop_footer
    %s16 = sadd.s32 1, %s12
  $region7: #{cnn_block_3d.2} parent=0 // loop_footer_branch
    %11 = sbr.rel target = $region3
  $region8: #{cnn_block_3d.2} parent=0 // loop_exit
    _

</llo_original>
